<compile_context>
chip_gen: v7x
topology: tpu7x:2x2x1
jax: 0.10.0
libtpu: 0.0.40
codegen_flags: <defaults>
</compile_context>

<pallas_src>
import functools
import math

import jax
import jax.numpy as jnp
from jax.experimental import pallas as pl
from jax.experimental.pallas import tpu as pltpu


def _round_up(x, m):
    return ((x + m - 1) // m) * m


def _bf16_round(x):
    return x.astype(jnp.bfloat16).astype(jnp.float32)


# ----------------------------------------------------------------------------
# In-kernel epilogue: dropout (identity), residual / dense-residual, state store.
# ----------------------------------------------------------------------------
def _finalize_layer(l, h_new, h_out_ref, prev_ref, acc_ref, *,
                    B, residual, dense_residual):
    """residual:       hx[l] += sum(hx[l-1])   (Python sum(tensor) == batch-dim
                       reduction broadcast back — kept for fidelity), l > 0.
       dense_residual: hx[l] += sum(hx[:l])    (elementwise sum of previous
                       layers' fresh, post-residual outputs)."""
    # dropout_l(.) is the identity in eval mode.
    if residual:
        rows = jax.lax.broadcasted_iota(jnp.int32, prev_ref.shape, 0)
        prev_valid = jnp.where(rows < B, prev_ref[...], 0.0)   # drop padded rows
        bsum = jnp.sum(prev_valid, axis=0, keepdims=True)      # sum over batch
        h_fin = h_new + (l > 0).astype(jnp.float32) * bsum
        # TODO(synk): the (residual and dense_residual) l == 0 corner of the
        # PyTorch precedence quirk is not replicated.
    elif dense_residual:
        h_fin = h_new + acc_ref[...]                           # += sum(hx[:l])
        acc_ref[...] = acc_ref[...] + h_fin                    # accumulate post-res h_l
    else:
        h_fin = h_new
    h_out_ref[l] = h_fin
    prev_ref[...] = h_fin                                      # next layer's input


# ----------------------------------------------------------------------------
# Fused multi-layer cell-step kernels (grid = (num_layers,)).
#   Weights per layer (bf16, densely packed, per gate):
#     wx0_ref: [G, D0, H]  layer-0 W_ih^T           (VMEM resident)
#     wx_ref:  [G, H, H]   deep-layer W_ih^T        (streamed, block max(l-1,0))
#     wh_ref:  [G, H, H]   W_hh^T                   (streamed, block l)
#     b_ref:   [nbG, 1, H] biases (f32)             (streamed, block l)
# ----------------------------------------------------------------------------
def _lstm_stack_kernel(x_ref, wx0_ref, wx_ref, wh_ref, b_ref,
                       hx_ref, cx_ref, h_out_ref, c_out_ref,
                       prev_ref, *rest, B, H, G, residual, dense_residual):
    acc_ref = rest[0] if dense_residual else None
    l = pl.program_id(0)

    @pl.when(l == 0)
    def _():
        prev_ref[...] = jnp.zeros_like(prev_ref)           # must not be NaN garbage
        if dense_residual:
            acc_ref[...] = jnp.zeros_like(acc_ref)

    h_old = hx_ref[l]
    c_old = cx_ref[l]
    x_b = x_ref[...].astype(jnp.bfloat16)
    prev_b = prev_ref[...].astype(jnp.bfloat16)
    h_b = h_old.astype(jnp.bfloat16)
    is0 = (l == 0).astype(jnp.float32)
    not0 = 1.0 - is0

    pre = []
    for g in range(G):                                      # PyTorch order i, f, g, o
        gx0 = jnp.dot(x_b, wx0_ref[g], preferred_element_type=jnp.float32)
        gxd = jnp.dot(prev_b, wx_ref[g], preferred_element_type=jnp.float32)
        ghh = jnp.dot(h_b, wh_ref[g], preferred_element_type=jnp.float32)
        pre.append(is0 * gx0 + not0 * gxd + ghh + b_ref[g])

    i = jax.nn.sigmoid(pre[0])
    f = jax.nn.sigmoid(pre[1])
    gg = jnp.tanh(pre[2])
    o = jax.nn.sigmoid(pre[3])

    c_new = f * c_old + i * gg
    h_new = o * jnp.tanh(c_new)
    c_out_ref[l] = c_new

    _finalize_layer(l, h_new, h_out_ref, prev_ref, acc_ref,
                    B=B, residual=residual, dense_residual=dense_residual)


def _gru_stack_kernel(x_ref, wx0_ref, wx_ref, wh_ref, b_ref,
                      hx_ref, h_out_ref,
                      prev_ref, *rest, B, H, G, residual, dense_residual):
    acc_ref = rest[0] if dense_residual else None
    l = pl.program_id(0)

    @pl.when(l == 0)
    def _():
        prev_ref[...] = jnp.zeros_like(prev_ref)
        if dense_residual:
            acc_ref[...] = jnp.zeros_like(acc_ref)

    h_old = hx_ref[l]
    x_b = x_ref[...].astype(jnp.bfloat16)
    prev_b = prev_ref[...].astype(jnp.bfloat16)
    h_b = h_old.astype(jnp.bfloat16)
    is0 = (l == 0).astype(jnp.float32)
    not0 = 1.0 - is0

    gi, gh = [], []
    for g in range(G):                                      # PyTorch order r, z, n
        gx0 = jnp.dot(x_b, wx0_ref[g], preferred_element_type=jnp.float32)
        gxd = jnp.dot(prev_b, wx_ref[g], preferred_element_type=jnp.float32)
        gi.append(is0 * gx0 + not0 * gxd + b_ref[g])
        gh.append(jnp.dot(h_b, wh_ref[g], preferred_element_type=jnp.float32)
                  + b_ref[G + g])

    r = jax.nn.sigmoid(gi[0] + gh[0])
    z = jax.nn.sigmoid(gi[1] + gh[1])
    n = jnp.tanh(gi[2] + r * gh[2])
    h_new = (1.0 - z) * n + z * h_old

    _finalize_layer(l, h_new, h_out_ref, prev_ref, acc_ref,
                    B=B, residual=residual, dense_residual=dense_residual)


# ----------------------------------------------------------------------------
# RNNDecoder: parameter construction + forward (glue in plain JAX).
# ----------------------------------------------------------------------------
class RNNDecoder:
    def __init__(self, input_size, rnn_type, num_units, num_layers, dropout,
                 residual=False, dense_residual=False, *, key):
        assert rnn_type in ('lstm', 'gru')
        self.input_size = input_size
        self.rnn_type = rnn_type
        self.num_units = num_units
        self.num_layers = num_layers
        self.dropout = dropout              # eval mode -> identity
        self.residual = residual
        self.dense_residual = dense_residual

        self.G = 4 if rnn_type == 'lstm' else 3
        G, H, L, D0 = self.G, num_units, num_layers, input_size
        self.nbG = G if rnn_type == 'lstm' else 2 * G
        Lx = max(L - 1, 1)

        stdv = 1.0 / math.sqrt(num_units)
        self.ref_params = []                                 # bf16-valued (stored f32)
        w_x0 = jnp.zeros((G, D0, H), jnp.float32)
        w_x = jnp.zeros((Lx, G, H, H), jnp.float32)
        w_h = jnp.zeros((L, G, H, H), jnp.float32)
        b_all = jnp.zeros((L, self.nbG, 1, H), jnp.float32)

        for l in range(L):
            in_sz = D0 if l == 0 else H
            key, k1, k2, k3, k4 = jax.random.split(key, 5)
            # The "true" module parameters are bf16 values (quantized model).
            w_ih = _bf16_round(jax.random.uniform(k1, (G * H, in_sz), jnp.float32,
                                                  -stdv, stdv))
            w_hh = _bf16_round(jax.random.uniform(k2, (G * H, H), jnp.float32,
                                                  -stdv, stdv))
            b_ih = jax.random.uniform(k3, (G * H,), jnp.float32, -stdv, stdv)
            b_hh = jax.random.uniform(k4, (G * H,), jnp.float32, -stdv, stdv)
            self.ref_params.append(dict(w_ih=w_ih, w_hh=w_hh, b_ih=b_ih, b_hh=b_hh))

            for g in range(G):
                wig = w_ih[g * H:(g + 1) * H, :].T           # [in_sz, H]
                whg = w_hh[g * H:(g + 1) * H, :].T           # [H, H]
                if l == 0:
                    w_x0 = w_x0.at[g].set(wig)
                else:
                    w_x = w_x.at[l - 1, g].set(wig)
                w_h = w_h.at[l, g].set(whg)
                if rnn_type == 'lstm':
                    b_all = b_all.at[l, g, 0].set(b_ih[g * H:(g + 1) * H]
                                                  + b_hh[g * H:(g + 1) * H])
                else:
                    b_all = b_all.at[l, g, 0].set(b_ih[g * H:(g + 1) * H])
                    b_all = b_all.at[l, G + g, 0].set(b_hh[g * H:(g + 1) * H])

        self.w_x0 = w_x0.astype(jnp.bfloat16)
        self.w_x = w_x.astype(jnp.bfloat16)
        self.w_h = w_h.astype(jnp.bfloat16)
        self.b_all = b_all                                   # biases kept f32
        self._step_cache = {}

    # -- VMEM budget ----------------------------------------------------------
    def _vmem_limit_bytes(self, Bp):
        H, G, L, D0 = self.num_units, self.G, self.num_layers, self.input_size
        n_state = 2 if self.rnn_type == 'lstm' else 1
        lane = lambda n: _round_up(max(n, 1), 128)
        sub = lambda n, m: _round_up(max(n, 1), m)
        b = sub(Bp, 8) * lane(D0) * 4                                  # x
        b += G * sub(D0, 16) * lane(H) * 2                             # w_x0 resident
        b += 2 * 2 * G * sub(H, 16) * lane(H) * 2                      # w_x + w_h (2-buf)
        b += 2 * self.nbG * 16 * lane(H) * 4                           # bias (2-buf)
        b += 2 * n_state * L * sub(Bp, 8) * lane(H) * 4                # state in + out
        b += (2 if self.dense_residual else 1) * sub(Bp, 8) * lane(H) * 4
        return int(min(96 << 20, max(16 << 20, 2 * b + (2 << 20))))

    # -- fused pallas step ----------------------------------------------------
    def _make_step(self, batch):
        L, H, G = self.num_layers, self.num_units, self.G
        D0 = self.input_size
        Bp = _round_up(max(batch, 1), 8)
        is_lstm = self.rnn_type == 'lstm'
        n_state = 2 if is_lstm else 1
        nbG = self.nbG

        kern_fn = _lstm_stack_kernel if is_lstm else _gru_stack_kernel
        kernel = functools.partial(
            kern_fn, B=batch, H=H, G=G,
            residual=self.residual, dense_residual=self.dense_residual)

        state_spec = pl.BlockSpec((L, Bp, H), lambda l: (0, 0, 0))     # VMEM resident
        in_specs = [
            pl.BlockSpec((Bp, D0), lambda l: (0, 0)),                  # x (resident)
            pl.BlockSpec((G, D0, H), lambda l: (0, 0, 0)),             # W_ih(0)^T (resident)
            pl.BlockSpec((None, G, H, H),
                         lambda l: (jnp.maximum(l - 1, 0), 0, 0, 0)),  # W_ih(l)^T, l>0
            pl.BlockSpec((None, G, H, H), lambda l: (l, 0, 0, 0)),     # W_hh(l)^T
            pl.BlockSpec((None, nbG, 1, H), lambda l: (l, 0, 0, 0)),   # biases
        ] + [state_spec] * n_state

        scratch = [pltpu.VMEM((Bp, H), jnp.float32)]                   # prev layer h
        if self.dense_residual:
            scratch.append(pltpu.VMEM((Bp, H), jnp.float32))           # dense-res acc

        grid_spec = pltpu.PrefetchScalarGridSpec(
            num_scalar_prefetch=0, grid=(L,),
            in_specs=in_specs,
            out_specs=tuple([state_spec] * n_state),
            scratch_shapes=scratch)

        out_shape = tuple(jax.ShapeDtypeStruct((L, Bp, H), jnp.float32)
                          for _ in range(n_state))
        aliases = {5: 0, 6: 1} if is_lstm else {5: 0}                  # in-place state

        call = pl.pallas_call(
            kernel,
            grid_spec=grid_spec,
            out_shape=out_shape,
            input_output_aliases=aliases,
            compiler_params=pltpu.CompilerParams(
                dimension_semantics=("arbitrary",),                    # layers sequential
                vmem_limit_bytes=self._vmem_limit_bytes(Bp)))

        def step(x, hx_pad, cx_pad, w_x0, w_x, w_h, b_all):
            x_pad = jnp.zeros((Bp, D0), jnp.float32).at[:batch, :].set(
                x.astype(jnp.float32))
            if is_lstm:
                h_new, c_new = call(x_pad, w_x0, w_x, w_h, b_all, hx_pad, cx_pad)
            else:
                (h_new,) = call(x_pad, w_x0, w_x, w_h, b_all, hx_pad)
                c_new = None
            dec_out = h_new[L - 1, :batch, :][:, None, :]              # [B, 1, H]
            return dec_out, h_new, c_new

        return jax.jit(step)

    def _get_step(self, batch):
        step = self._step_cache.get(batch)
        if step is None:
            step = self._make_step(batch)
            self._step_cache[batch] = step
        return step

    # -- padded-state helpers (fast autoregressive path) -----------------------
    def pad_state(self, hx_list, cx_list, batch):
        L, H = self.num_layers, self.num_units
        Bp = _round_up(max(batch, 1), 8)
        hx_pad = jnp.zeros((L, Bp, H), jnp.float32).at[:, :batch, :].set(
            jnp.stack(hx_list).astype(jnp.float32))
        cx_pad = None
        if cx_list is not None:
            cx_pad = jnp.zeros((L, Bp, H), jnp.float32).at[:, :batch, :].set(
                jnp.stack(cx_list).astype(jnp.float32))
        return hx_pad, cx_pad

    def step_padded(self, dec_in, hx_pad, cx_pad=None):
        """dec_in: [B, 1, input_size] or [B, input_size]; state stays padded."""
        x = dec_in[:, 0, :] if dec_in.ndim == 3 else dec_in
        B = x.shape[0]
        return self._get_step(B)(x, hx_pad, cx_pad,
                                 self.w_x0, self.w_x, self.w_h, self.b_all)

    # -- PyTorch-compatible forward -------------------------------------------
    def __call__(self, dec_in, dec_state):
        """dec_in: [B, 1, input_size]; dec_state: (hx_list, cx_list) or hx_list."""
        if self.rnn_type == 'lstm':
            hx_list, cx_list = list(dec_state[0]), list(dec_state[1])
        else:
            hx_list, cx_list = list(dec_state), None
        x = jnp.asarray(dec_in)[:, 0, :]
        B = x.shape[0]
        hx_pad, cx_pad = self.pad_state(hx_list, cx_list, B)
        dec_out, h_new, c_new = self._get_step(B)(
            x, hx_pad, cx_pad, self.w_x0, self.w_x, self.w_h, self.b_all)

        hx_out = [h_new[l, :B, :] for l in range(self.num_layers)]
        if self.rnn_type == 'lstm':
            cx_out = [c_new[l, :B, :] for l in range(self.num_layers)]
            return dec_out, (hx_out, cx_out)
        return dec_out, hx_out


# ----------------------------------------------------------------------------
# Pure-jnp reference (replicates the PyTorch module; matmul operands rounded to
# bf16 to mirror the kernel's bf16 MXU inputs).
# ----------------------------------------------------------------------------
def _ref_forward(dec, dec_in, dec_state):
    H = dec.num_units
    if dec.rnn_type == 'lstm':
        hx, cx = list(dec_state[0]), list(dec_state[1])
    else:
        hx, cx = list(dec_state), None
    x = jnp.asarray(dec_in)[:, 0, :]
    for l in range(dec.num_layers):
        p = dec.ref_params[l]
        inp = _bf16_round(x if l == 0 else hx[l - 1])
        h_q = _bf16_round(hx[l])
        if dec.rnn_type == 'lstm':
            g = inp @ p['w_ih'].T + p['b_ih'] + h_q @ p['w_hh'].T + p['b_hh']
            i = jax.nn.sigmoid(g[:, 0 * H:1 * H])
            f = jax.nn.sigmoid(g[:, 1 * H:2 * H])
            gg = jnp.tanh(g[:, 2 * H:3 * H])
            o = jax.nn.sigmoid(g[:, 3 * H:4 * H])
            cx[l] = f * cx[l] + i * gg
            hx[l] = o * jnp.tanh(cx[l])
        else:
            gi = inp @ p['w_ih'].T + p['b_ih']
            gh = h_q @ p['w_hh'].T + p['b_hh']
            r = jax.nn.sigmoid(gi[:, 0 * H:1 * H] + gh[:, 0 * H:1 * H])
            z = jax.nn.sigmoid(gi[:, 1 * H:2 * H] + gh[:, 1 * H:2 * H])
            n = jnp.tanh(gi[:, 2 * H:3 * H] + r * gh[:, 2 * H:3 * H])
            hx[l] = (1.0 - z) * n + z * hx[l]
        # dropout: identity (eval)
        if (l > 0 and dec.residual) or dec.dense_residual:
            if dec.residual:
                hx[l] = hx[l] + jnp.sum(hx[l - 1], axis=0)   # PyTorch sum(tensor)
            elif dec.dense_residual and l > 0:
                acc = hx[0]
                for j in range(1, l):
                    acc = acc + hx[j]
                hx[l] = hx[l] + acc
    out = hx[-1][:, None, :]
    return (out, (hx, cx)) if dec.rnn_type == 'lstm' else (out, hx)


if __name__ == "__main__":
    key = jax.random.PRNGKey(0)
    B, input_size, num_units, num_layers = 2, 48, 32, 2
    ATOL = RTOL = 2e-2

    configs = [
        ('lstm', False, False),
        ('gru', False, False),
        ('lstm', True, False),    # residual
        ('lstm', False, True),    # dense residual
    ]
    first_lstm = None
    first_state = None
    for rnn_type, residual, dense_residual in configs:
        key, kp, kx, kh = jax.random.split(key, 4)
        dec = RNNDecoder(input_size, rnn_type, num_units, num_layers,
                         dropout=0.0, residual=residual,
                         dense_residual=dense_residual, key=kp)

        dec_in = jax.random.normal(kx, (B, 1, input_size), jnp.float32)
        khs = jax.random.split(kh, 2 * num_layers)
        hx_list = [0.1 * jax.random.normal(khs[l], (B, num_units), jnp.float32)
                   for l in range(num_layers)]
        cx_list = [0.1 * jax.random.normal(khs[num_layers + l], (B, num_units),
                                           jnp.float32)
                   for l in range(num_layers)]
        state = (hx_list, cx_list) if rnn_type == 'lstm' else hx_list

        dec_out, new_state = dec(dec_in, state)
        dec_out = jax.block_until_ready(dec_out)

        ref_out, ref_state = _ref_forward(dec, dec_in, state)
        cfg = (rnn_type, residual, dense_residual)
        assert dec_out.shape == (B, 1, num_units), cfg
        assert jnp.allclose(dec_out, ref_out, atol=ATOL, rtol=RTOL), cfg
        if rnn_type == 'lstm':
            (hx_new, cx_new), (hx_ref, cx_ref) = new_state, ref_state
            for l in range(num_layers):
                assert jnp.allclose(hx_new[l], hx_ref[l], atol=ATOL, rtol=RTOL), cfg
                assert jnp.allclose(cx_new[l], cx_ref[l], atol=ATOL, rtol=RTOL), cfg
        else:
            for l in range(num_layers):
                assert jnp.allclose(new_state[l], ref_state[l],
                                    atol=ATOL, rtol=RTOL), cfg

        if first_lstm is None and rnn_type == 'lstm':
            first_lstm = dec
            first_state = (hx_list, cx_list)

    # Autoregressive fast path: state carried in padded [L, Bp, H] form, so no
    # per-step pad/stack/slice XLA kernels between decode steps.
    dec = first_lstm
    hx_list, cx_list = first_state
    hx_pad, cx_pad = dec.pad_state(hx_list, cx_list, B)
    ref_hx, ref_cx = list(hx_list), list(cx_list)
    for _ in range(4):
        key, kx = jax.random.split(key)
        dec_in = jax.random.normal(kx, (B, 1, input_size), jnp.float32)
        dec_out, hx_pad, cx_pad = dec.step_padded(dec_in, hx_pad, cx_pad)
        ref_out, (ref_hx, ref_cx) = _ref_forward(dec, dec_in, (ref_hx, ref_cx))
    dec_out = jax.block_until_ready(dec_out)
    assert jnp.allclose(dec_out, ref_out, atol=3e-2, rtol=3e-2)
    for l in range(num_layers):
        assert jnp.allclose(hx_pad[l, :B, :], ref_hx[l], atol=3e-2, rtol=3e-2)
        assert jnp.allclose(cx_pad[l, :B, :], ref_cx[l], atol=3e-2, rtol=3e-2)

    print("KERNEL_OK")
</pallas_src>

<mosaic_0001>
module attributes {stable_mosaic.version = 11 : i64} {
  func.func @_lstm_stack_kernel(%arg0: i32, %arg1: memref<8x48xf32, #tpu.memory_space<vmem>>, %arg2: memref<4x48x32xbf16, #tpu.memory_space<vmem>>, %arg3: memref<1x4x32x32xbf16, #tpu.memory_space<vmem>>, %arg4: memref<1x4x32x32xbf16, #tpu.memory_space<vmem>>, %arg5: memref<1x4x1x32xf32, #tpu.memory_space<vmem>>, %arg6: memref<2x8x32xf32, #tpu.memory_space<vmem>>, %arg7: memref<2x8x32xf32, #tpu.memory_space<vmem>>, %arg8: memref<2x8x32xf32, #tpu.memory_space<vmem>>, %arg9: memref<2x8x32xf32, #tpu.memory_space<vmem>>, %arg10: memref<8x32xf32, #tpu.memory_space<vmem>>) attributes {dimension_semantics = [#tpu.dimension_semantics<arbitrary>], iteration_bounds = array<i64: 2>, scalar_prefetch = 0 : i64, scratch_operands = 1 : i64, tpu.core_type = #tpu.core_type<tc>, window_params = [{pipeline_mode = #tpu.pipeline_mode<synchronous>, transform_indices = @transform_0, window_bounds = array<i64: 8, 48>}, {pipeline_mode = #tpu.pipeline_mode<synchronous>, transform_indices = @transform_1, window_bounds = array<i64: 4, 48, 32>}, {transform_indices = @transform_2, window_bounds = array<i64: 1, 4, 32, 32>}, {transform_indices = @transform_3, window_bounds = array<i64: 1, 4, 32, 32>}, {transform_indices = @transform_4, window_bounds = array<i64: 1, 4, 1, 32>}, {pipeline_mode = #tpu.pipeline_mode<synchronous>, transform_indices = @transform_5, window_bounds = array<i64: 2, 8, 32>}, {pipeline_mode = #tpu.pipeline_mode<synchronous>, transform_indices = @transform_6, window_bounds = array<i64: 2, 8, 32>}, {pipeline_mode = #tpu.pipeline_mode<synchronous>, transform_indices = @transform_7, window_bounds = array<i64: 2, 8, 32>}, {pipeline_mode = #tpu.pipeline_mode<synchronous>, transform_indices = @transform_8, window_bounds = array<i64: 2, 8, 32>}]} {
    %c0_i32 = arith.constant 0 : i32
    %0 = arith.cmpi eq, %arg0, %c0_i32 : i32
    %1 = arith.extui %0 : i1 to i32
    %c0_i32_0 = arith.constant 0 : i32
    %2 = arith.cmpi ne, %1, %c0_i32_0 : i32
    scf.if %2 {
      %cst_87 = arith.constant 0.000000e+00 : f32
      %124 = vector.broadcast %cst_87 : f32 to vector<8x32xf32>
      %c0_88 = arith.constant 0 : index
      %c0_89 = arith.constant 0 : index
      %125 = vector.load %arg10[%c0_88, %c0_89] : memref<8x32xf32, #tpu.memory_space<vmem>>, vector<8x32xf32>
      tpu.vector_store %arg10[%c0_88, %c0_89], %124 {strides = array<i32>} : memref<8x32xf32, #tpu.memory_space<vmem>>, vector<8x32xf32>,
    } else {
    }
    %3 = arith.index_cast %arg0 : i32 to index
    %c0 = arith.constant 0 : index
    %c0_1 = arith.constant 0 : index
    %4 = vector.load %arg6[%3, %c0, %c0_1] : memref<2x8x32xf32, #tpu.memory_space<vmem>>, vector<1x8x32xf32>
    %5 = vector.shape_cast %4 : vector<1x8x32xf32> to vector<8x32xf32>
    %6 = arith.index_cast %arg0 : i32 to index
    %c0_2 = arith.constant 0 : index
    %c0_3 = arith.constant 0 : index
    %7 = vector.load %arg7[%6, %c0_2, %c0_3] : memref<2x8x32xf32, #tpu.memory_space<vmem>>, vector<1x8x32xf32>
    %8 = vector.shape_cast %7 : vector<1x8x32xf32> to vector<8x32xf32>
    %c0_4 = arith.constant 0 : index
    %c0_5 = arith.constant 0 : index
    %9 = vector.load %arg1[%c0_4, %c0_5] : memref<8x48xf32, #tpu.memory_space<vmem>>, vector<8x48xf32>
    %10 = arith.truncf %9 : vector<8x48xf32> to vector<8x48xbf16>
    %c0_6 = arith.constant 0 : index
    %c0_7 = arith.constant 0 : index
    %11 = vector.load %arg10[%c0_6, %c0_7] : memref<8x32xf32, #tpu.memory_space<vmem>>, vector<8x32xf32>
    %12 = arith.truncf %11 : vector<8x32xf32> to vector<8x32xbf16>
    %13 = arith.truncf %5 : vector<8x32xf32> to vector<8x32xbf16>
    %c0_i32_8 = arith.constant 0 : i32
    %14 = arith.cmpi eq, %arg0, %c0_i32_8 : i32
    %15 = arith.extui %14 : i1 to i32
    %16 = arith.sitofp %15 : i32 to f32
    %cst = arith.constant 1.000000e+00 : f32
    %17 = arith.subf %cst, %16 : f32
    %c0_9 = arith.constant 0 : index
    %c0_10 = arith.constant 0 : index
    %c0_11 = arith.constant 0 : index
    %18 = vector.load %arg2[%c0_9, %c0_10, %c0_11] : memref<4x48x32xbf16, #tpu.memory_space<vmem>>, vector<1x48x32xbf16>
    %19 = vector.shape_cast %18 : vector<1x48x32xbf16> to vector<48x32xbf16>
    %cst_12 = arith.constant dense<0.000000e+00> : vector<8x32xf32>
    %20 = tpu.matmul %10, %19, %cst_12 {dimension_numbers = #tpu.dot_dimension_numbers<[1], [0], [0], [1], [0, 0, 1, 1], [], []>} : vector<8x48xbf16>, vector<48x32xbf16>, vector<8x32xf32> -> vector<8x32xf32>
    %c0_13 = arith.constant 0 : index
    %c0_14 = arith.constant 0 : index
    %c0_15 = arith.constant 0 : index
    %c0_16 = arith.constant 0 : index
    %21 = vector.load %arg3[%c0_13, %c0_14, %c0_15, %c0_16] : memref<1x4x32x32xbf16, #tpu.memory_space<vmem>>, vector<1x1x32x32xbf16>
    %22 = vector.shape_cast %21 : vector<1x1x32x32xbf16> to vector<32x32xbf16>
    %cst_17 = arith.constant dense<0.000000e+00> : vector<8x32xf32>
    %23 = tpu.matmul %12, %22, %cst_17 {dimension_numbers = #tpu.dot_dimension_numbers<[1], [0], [0], [1], [0, 0, 1, 1], [], []>} : vector<8x32xbf16>, vector<32x32xbf16>, vector<8x32xf32> -> vector<8x32xf32>
    %c0_18 = arith.constant 0 : index
    %c0_19 = arith.constant 0 : index
    %c0_20 = arith.constant 0 : index
    %c0_21 = arith.constant 0 : index
    %24 = vector.load %arg4[%c0_18, %c0_19, %c0_20, %c0_21] : memref<1x4x32x32xbf16, #tpu.memory_space<vmem>>, vector<1x1x32x32xbf16>
    %25 = vector.shape_cast %24 : vector<1x1x32x32xbf16> to vector<32x32xbf16>
    %cst_22 = arith.constant dense<0.000000e+00> : vector<8x32xf32>
    %26 = tpu.matmul %13, %25, %cst_22 {dimension_numbers = #tpu.dot_dimension_numbers<[1], [0], [0], [1], [0, 0, 1, 1], [], []>} : vector<8x32xbf16>, vector<32x32xbf16>, vector<8x32xf32> -> vector<8x32xf32>
    %27 = vector.broadcast %16 : f32 to vector<8x32xf32>
    %28 = arith.mulf %27, %20 : vector<8x32xf32>
    %29 = vector.broadcast %17 : f32 to vector<8x32xf32>
    %30 = arith.mulf %29, %23 : vector<8x32xf32>
    %31 = arith.addf %28, %30 : vector<8x32xf32>
    %32 = arith.addf %31, %26 : vector<8x32xf32>
    %c0_23 = arith.constant 0 : index
    %c0_24 = arith.constant 0 : index
    %c0_25 = arith.constant 0 : index
    %c0_26 = arith.constant 0 : index
    %33 = vector.load %arg5[%c0_23, %c0_24, %c0_25, %c0_26] : memref<1x4x1x32xf32, #tpu.memory_space<vmem>>, vector<1x1x1x32xf32>
    %34 = vector.shape_cast %33 : vector<1x1x1x32xf32> to vector<1x32xf32>
    %35 = vector.broadcast %34 : vector<1x32xf32> to vector<8x32xf32>
    %36 = arith.addf %32, %35 : vector<8x32xf32>
    %c1 = arith.constant 1 : index
    %c0_27 = arith.constant 0 : index
    %c0_28 = arith.constant 0 : index
    %37 = vector.load %arg2[%c1, %c0_27, %c0_28] : memref<4x48x32xbf16, #tpu.memory_space<vmem>>, vector<1x48x32xbf16>
    %38 = vector.shape_cast %37 : vector<1x48x32xbf16> to vector<48x32xbf16>
    %cst_29 = arith.constant dense<0.000000e+00> : vector<8x32xf32>
    %39 = tpu.matmul %10, %38, %cst_29 {dimension_numbers = #tpu.dot_dimension_numbers<[1], [0], [0], [1], [0, 0, 1, 1], [], []>} : vector<8x48xbf16>, vector<48x32xbf16>, vector<8x32xf32> -> vector<8x32xf32>
    %c0_30 = arith.constant 0 : index
    %c1_31 = arith.constant 1 : index
    %c0_32 = arith.constant 0 : index
    %c0_33 = arith.constant 0 : index
    %40 = vector.load %arg3[%c0_30, %c1_31, %c0_32, %c0_33] : memref<1x4x32x32xbf16, #tpu.memory_space<vmem>>, vector<1x1x32x32xbf16>
    %41 = vector.shape_cast %40 : vector<1x1x32x32xbf16> to vector<32x32xbf16>
    %cst_34 = arith.constant dense<0.000000e+00> : vector<8x32xf32>
    %42 = tpu.matmul %12, %41, %cst_34 {dimension_numbers = #tpu.dot_dimension_numbers<[1], [0], [0], [1], [0, 0, 1, 1], [], []>} : vector<8x32xbf16>, vector<32x32xbf16>, vector<8x32xf32> -> vector<8x32xf32>
    %c0_35 = arith.constant 0 : index
    %c1_36 = arith.constant 1 : index
    %c0_37 = arith.constant 0 : index
    %c0_38 = arith.constant 0 : index
    %43 = vector.load %arg4[%c0_35, %c1_36, %c0_37, %c0_38] : memref<1x4x32x32xbf16, #tpu.memory_space<vmem>>, vector<1x1x32x32xbf16>
    %44 = vector.shape_cast %43 : vector<1x1x32x32xbf16> to vector<32x32xbf16>
    %cst_39 = arith.constant dense<0.000000e+00> : vector<8x32xf32>
    %45 = tpu.matmul %13, %44, %cst_39 {dimension_numbers = #tpu.dot_dimension_numbers<[1], [0], [0], [1], [0, 0, 1, 1], [], []>} : vector<8x32xbf16>, vector<32x32xbf16>, vector<8x32xf32> -> vector<8x32xf32>
    %46 = vector.broadcast %16 : f32 to vector<8x32xf32>
    %47 = arith.mulf %46, %39 : vector<8x32xf32>
    %48 = vector.broadcast %17 : f32 to vector<8x32xf32>
    %49 = arith.mulf %48, %42 : vector<8x32xf32>
    %50 = arith.addf %47, %49 : vector<8x32xf32>
    %51 = arith.addf %50, %45 : vector<8x32xf32>
    %c0_40 = arith.constant 0 : index
    %c1_41 = arith.constant 1 : index
    %c0_42 = arith.constant 0 : index
    %c0_43 = arith.constant 0 : index
    %52 = vector.load %arg5[%c0_40, %c1_41, %c0_42, %c0_43] : memref<1x4x1x32xf32, #tpu.memory_space<vmem>>, vector<1x1x1x32xf32>
    %53 = vector.shape_cast %52 : vector<1x1x1x32xf32> to vector<1x32xf32>
    %54 = vector.broadcast %53 : vector<1x32xf32> to vector<8x32xf32>
    %55 = arith.addf %51, %54 : vector<8x32xf32>
    %c2 = arith.constant 2 : index
    %c0_44 = arith.constant 0 : index
    %c0_45 = arith.constant 0 : index
    %56 = vector.load %arg2[%c2, %c0_44, %c0_45] : memref<4x48x32xbf16, #tpu.memory_space<vmem>>, vector<1x48x32xbf16>
    %57 = vector.shape_cast %56 : vector<1x48x32xbf16> to vector<48x32xbf16>
    %cst_46 = arith.constant dense<0.000000e+00> : vector<8x32xf32>
    %58 = tpu.matmul %10, %57, %cst_46 {dimension_numbers = #tpu.dot_dimension_numbers<[1], [0], [0], [1], [0, 0, 1, 1], [], []>} : vector<8x48xbf16>, vector<48x32xbf16>, vector<8x32xf32> -> vector<8x32xf32>
    %c0_47 = arith.constant 0 : index
    %c2_48 = arith.constant 2 : index
    %c0_49 = arith.constant 0 : index
    %c0_50 = arith.constant 0 : index
    %59 = vector.load %arg3[%c0_47, %c2_48, %c0_49, %c0_50] : memref<1x4x32x32xbf16, #tpu.memory_space<vmem>>, vector<1x1x32x32xbf16>
    %60 = vector.shape_cast %59 : vector<1x1x32x32xbf16> to vector<32x32xbf16>
    %cst_51 = arith.constant dense<0.000000e+00> : vector<8x32xf32>
    %61 = tpu.matmul %12, %60, %cst_51 {dimension_numbers = #tpu.dot_dimension_numbers<[1], [0], [0], [1], [0, 0, 1, 1], [], []>} : vector<8x32xbf16>, vector<32x32xbf16>, vector<8x32xf32> -> vector<8x32xf32>
    %c0_52 = arith.constant 0 : index
    %c2_53 = arith.constant 2 : index
    %c0_54 = arith.constant 0 : index
    %c0_55 = arith.constant 0 : index
    %62 = vector.load %arg4[%c0_52, %c2_53, %c0_54, %c0_55] : memref<1x4x32x32xbf16, #tpu.memory_space<vmem>>, vector<1x1x32x32xbf16>
    %63 = vector.shape_cast %62 : vector<1x1x32x32xbf16> to vector<32x32xbf16>
    %cst_56 = arith.constant dense<0.000000e+00> : vector<8x32xf32>
    %64 = tpu.matmul %13, %63, %cst_56 {dimension_numbers = #tpu.dot_dimension_numbers<[1], [0], [0], [1], [0, 0, 1, 1], [], []>} : vector<8x32xbf16>, vector<32x32xbf16>, vector<8x32xf32> -> vector<8x32xf32>
    %65 = vector.broadcast %16 : f32 to vector<8x32xf32>
    %66 = arith.mulf %65, %58 : vector<8x32xf32>
    %67 = vector.broadcast %17 : f32 to vector<8x32xf32>
    %68 = arith.mulf %67, %61 : vector<8x32xf32>
    %69 = arith.addf %66, %68 : vector<8x32xf32>
    %70 = arith.addf %69, %64 : vector<8x32xf32>
    %c0_57 = arith.constant 0 : index
    %c2_58 = arith.constant 2 : index
    %c0_59 = arith.constant 0 : index
    %c0_60 = arith.constant 0 : index
    %71 = vector.load %arg5[%c0_57, %c2_58, %c0_59, %c0_60] : memref<1x4x1x32xf32, #tpu.memory_space<vmem>>, vector<1x1x1x32xf32>
    %72 = vector.shape_cast %71 : vector<1x1x1x32xf32> to vector<1x32xf32>
    %73 = vector.broadcast %72 : vector<1x32xf32> to vector<8x32xf32>
    %74 = arith.addf %70, %73 : vector<8x32xf32>
    %c3 = arith.constant 3 : index
    %c0_61 = arith.constant 0 : index
    %c0_62 = arith.constant 0 : index
    %75 = vector.load %arg2[%c3, %c0_61, %c0_62] : memref<4x48x32xbf16, #tpu.memory_space<vmem>>, vector<1x48x32xbf16>
    %76 = vector.shape_cast %75 : vector<1x48x32xbf16> to vector<48x32xbf16>
    %cst_63 = arith.constant dense<0.000000e+00> : vector<8x32xf32>
    %77 = tpu.matmul %10, %76, %cst_63 {dimension_numbers = #tpu.dot_dimension_numbers<[1], [0], [0], [1], [0, 0, 1, 1], [], []>} : vector<8x48xbf16>, vector<48x32xbf16>, vector<8x32xf32> -> vector<8x32xf32>
    %c0_64 = arith.constant 0 : index
    %c3_65 = arith.constant 3 : index
    %c0_66 = arith.constant 0 : index
    %c0_67 = arith.constant 0 : index
    %78 = vector.load %arg3[%c0_64, %c3_65, %c0_66, %c0_67] : memref<1x4x32x32xbf16, #tpu.memory_space<vmem>>, vector<1x1x32x32xbf16>
    %79 = vector.shape_cast %78 : vector<1x1x32x32xbf16> to vector<32x32xbf16>
    %cst_68 = arith.constant dense<0.000000e+00> : vector<8x32xf32>
    %80 = tpu.matmul %12, %79, %cst_68 {dimension_numbers = #tpu.dot_dimension_numbers<[1], [0], [0], [1], [0, 0, 1, 1], [], []>} : vector<8x32xbf16>, vector<32x32xbf16>, vector<8x32xf32> -> vector<8x32xf32>
    %c0_69 = arith.constant 0 : index
    %c3_70 = arith.constant 3 : index
    %c0_71 = arith.constant 0 : index
    %c0_72 = arith.constant 0 : index
    %81 = vector.load %arg4[%c0_69, %c3_70, %c0_71, %c0_72] : memref<1x4x32x32xbf16, #tpu.memory_space<vmem>>, vector<1x1x32x32xbf16>
    %82 = vector.shape_cast %81 : vector<1x1x32x32xbf16> to vector<32x32xbf16>
    %cst_73 = arith.constant dense<0.000000e+00> : vector<8x32xf32>
    %83 = tpu.matmul %13, %82, %cst_73 {dimension_numbers = #tpu.dot_dimension_numbers<[1], [0], [0], [1], [0, 0, 1, 1], [], []>} : vector<8x32xbf16>, vector<32x32xbf16>, vector<8x32xf32> -> vector<8x32xf32>
    %84 = vector.broadcast %16 : f32 to vector<8x32xf32>
    %85 = arith.mulf %84, %77 : vector<8x32xf32>
    %86 = vector.broadcast %17 : f32 to vector<8x32xf32>
    %87 = arith.mulf %86, %80 : vector<8x32xf32>
    %88 = arith.addf %85, %87 : vector<8x32xf32>
    %89 = arith.addf %88, %83 : vector<8x32xf32>
    %c0_74 = arith.constant 0 : index
    %c3_75 = arith.constant 3 : index
    %c0_76 = arith.constant 0 : index
    %c0_77 = arith.constant 0 : index
    %90 = vector.load %arg5[%c0_74, %c3_75, %c0_76, %c0_77] : memref<1x4x1x32xf32, #tpu.memory_space<vmem>>, vector<1x1x1x32xf32>
    %91 = vector.shape_cast %90 : vector<1x1x1x32xf32> to vector<1x32xf32>
    %92 = vector.broadcast %91 : vector<1x32xf32> to vector<8x32xf32>
    %93 = arith.addf %89, %92 : vector<8x32xf32>
    %94 = arith.negf %36 : vector<8x32xf32>
    %95 = math.exp %94 : vector<8x32xf32>
    %cst_78 = arith.constant 1.000000e+00 : f32
    %96 = vector.broadcast %cst_78 : f32 to vector<8x32xf32>
    %97 = arith.addf %96, %95 : vector<8x32xf32>
    %98 = arith.divf %96, %97 : vector<8x32xf32>
    %99 = arith.negf %55 : vector<8x32xf32>
    %100 = math.exp %99 : vector<8x32xf32>
    %cst_79 = arith.constant 1.000000e+00 : f32
    %101 = vector.broadcast %cst_79 : f32 to vector<8x32xf32>
    %102 = arith.addf %101, %100 : vector<8x32xf32>
    %103 = arith.divf %101, %102 : vector<8x32xf32>
    %104 = math.tanh %74 : vector<8x32xf32>
    %105 = arith.negf %93 : vector<8x32xf32>
    %106 = math.exp %105 : vector<8x32xf32>
    %cst_80 = arith.constant 1.000000e+00 : f32
    %107 = vector.broadcast %cst_80 : f32 to vector<8x32xf32>
    %108 = arith.addf %107, %106 : vector<8x32xf32>
    %109 = arith.divf %107, %108 : vector<8x32xf32>
    %110 = arith.mulf %103, %8 : vector<8x32xf32>
    %111 = arith.mulf %98, %104 : vector<8x32xf32>
    %112 = arith.addf %110, %111 : vector<8x32xf32>
    %113 = math.tanh %112 : vector<8x32xf32>
    %114 = arith.mulf %109, %113 : vector<8x32xf32>
    %115 = arith.index_cast %arg0 : i32 to index
    %c0_81 = arith.constant 0 : index
    %c0_82 = arith.constant 0 : index
    %116 = vector.load %arg9[%115, %c0_81, %c0_82] : memref<2x8x32xf32, #tpu.memory_space<vmem>>, vector<1x8x32xf32>
    %117 = vector.shape_cast %116 : vector<1x8x32xf32> to vector<8x32xf32>
    %118 = vector.shape_cast %112 : vector<8x32xf32> to vector<1x8x32xf32>
    tpu.vector_store %arg9[%115, %c0_81, %c0_82], %118 {strides = array<i32>} : memref<2x8x32xf32, #tpu.memory_space<vmem>>, vector<1x8x32xf32>,
    %119 = arith.index_cast %arg0 : i32 to index
    %c0_83 = arith.constant 0 : index
    %c0_84 = arith.constant 0 : index
    %120 = vector.load %arg8[%119, %c0_83, %c0_84] : memref<2x8x32xf32, #tpu.memory_space<vmem>>, vector<1x8x32xf32>
    %121 = vector.shape_cast %120 : vector<1x8x32xf32> to vector<8x32xf32>
    %122 = vector.shape_cast %114 : vector<8x32xf32> to vector<1x8x32xf32>
    tpu.vector_store %arg8[%119, %c0_83, %c0_84], %122 {strides = array<i32>} : memref<2x8x32xf32, #tpu.memory_space<vmem>>, vector<1x8x32xf32>,
    %c0_85 = arith.constant 0 : index
    %c0_86 = arith.constant 0 : index
    %123 = vector.load %arg10[%c0_85, %c0_86] : memref<8x32xf32, #tpu.memory_space<vmem>>, vector<8x32xf32>
    tpu.vector_store %arg10[%c0_85, %c0_86], %114 {strides = array<i32>} : memref<8x32xf32, #tpu.memory_space<vmem>>, vector<8x32xf32>,
    return
  }
  func.func @transform_0(%arg0: i32) -> (i32, i32) {
    %c0_i32 = arith.constant 0 : i32
    %c0_i32_0 = arith.constant 0 : i32
    %c0_i32_1 = arith.constant 0 : i32
    return %c0_i32, %c0_i32_0 : i32, i32
  }
  func.func @transform_1(%arg0: i32) -> (i32, i32, i32) {
    %c0_i32 = arith.constant 0 : i32
    %c0_i32_0 = arith.constant 0 : i32
    %c0_i32_1 = arith.constant 0 : i32
    %c0_i32_2 = arith.constant 0 : i32
    return %c0_i32, %c0_i32_0, %c0_i32_1 : i32, i32, i32
  }
  func.func @transform_2(%arg0: i32) -> (i32, i32, i32, i32) {
    %c1_i32 = arith.constant 1 : i32
    %0 = arith.subi %arg0, %c1_i32 : i32
    %c0_i32 = arith.constant 0 : i32
    %1 = arith.maxsi %0, %c0_i32 : i32
    %c0_i32_0 = arith.constant 0 : i32
    %c0_i32_1 = arith.constant 0 : i32
    %c0_i32_2 = arith.constant 0 : i32
    %c0_i32_3 = arith.constant 0 : i32
    return %1, %c0_i32_0, %c0_i32_1, %c0_i32_2 : i32, i32, i32, i32
  }
  func.func @transform_3(%arg0: i32) -> (i32, i32, i32, i32) {
    %c0_i32 = arith.constant 0 : i32
    %c0_i32_0 = arith.constant 0 : i32
    %c0_i32_1 = arith.constant 0 : i32
    %c0_i32_2 = arith.constant 0 : i32
    return %arg0, %c0_i32, %c0_i32_0, %c0_i32_1 : i32, i32, i32, i32
  }
  func.func @transform_4(%arg0: i32) -> (i32, i32, i32, i32) {
    %c0_i32 = arith.constant 0 : i32
    %c0_i32_0 = arith.constant 0 : i32
    %c0_i32_1 = arith.constant 0 : i32
    %c0_i32_2 = arith.constant 0 : i32
    return %arg0, %c0_i32, %c0_i32_0, %c0_i32_1 : i32, i32, i32, i32
  }
  func.func @transform_5(%arg0: i32) -> (i32, i32, i32) {
    %c0_i32 = arith.constant 0 : i32
    %c0_i32_0 = arith.constant 0 : i32
    %c0_i32_1 = arith.constant 0 : i32
    %c0_i32_2 = arith.constant 0 : i32
    return %c0_i32, %c0_i32_0, %c0_i32_1 : i32, i32, i32
  }
  func.func @transform_6(%arg0: i32) -> (i32, i32, i32) {
    %c0_i32 = arith.constant 0 : i32
    %c0_i32_0 = arith.constant 0 : i32
    %c0_i32_1 = arith.constant 0 : i32
    %c0_i32_2 = arith.constant 0 : i32
    return %c0_i32, %c0_i32_0, %c0_i32_1 : i32, i32, i32
  }
  func.func @transform_7(%arg0: i32) -> (i32, i32, i32) {
    %c0_i32 = arith.constant 0 : i32
    %c0_i32_0 = arith.constant 0 : i32
    %c0_i32_1 = arith.constant 0 : i32
    %c0_i32_2 = arith.constant 0 : i32
    return %c0_i32, %c0_i32_0, %c0_i32_1 : i32, i32, i32
  }
  func.func @transform_8(%arg0: i32) -> (i32, i32, i32) {
    %c0_i32 = arith.constant 0 : i32
    %c0_i32_0 = arith.constant 0 : i32
    %c0_i32_1 = arith.constant 0 : i32
    %c0_i32_2 = arith.constant 0 : i32
    return %c0_i32, %c0_i32_0, %c0_i32_1 : i32, i32, i32
  }
}

</mosaic_0001>

<llo_original>
// kernel: step.1
$region0: #{step.1}
  #allocation0 [shape = 'u32[]', space=smem, size = 0x4, offset = 0x4, fixed_abs, tag = 'smem constant byte address 0x4 - core index']
  #allocation1 [shape = 'u32[144,128]{1,0:T(1,128)}', space=vmem, size = 0x12000, scoped, tag = 'internal scratch']
  #allocation2 [shape = 'f32[8,32]{1,0:T(8,128)}', space=vmem, size = 0x1000, scoped, tag = 'scratch operand']
  %s0 = inlined_call_operand.vmem [shape: f32[8,48], index: 0, kind: input, shape index: {}]
  %s1 = inlined_call_operand.vmem [shape: bf16[4,48,32], index: 1, kind: input, shape index: {}]
  %s2 = inlined_call_operand.hbm [shape: bf16[1,4,32,32], index: 2, kind: input, shape index: {}]
  %s3 = inlined_call_operand.vmem [shape: bf16[2,4,32,32], index: 3, kind: input, shape index: {}]
  %s4 = inlined_call_operand.vmem [shape: f32[2,4,1,32], index: 4, kind: input, shape index: {}]
  %s5 = inlined_call_operand.vmem [shape: f32[2,8,32], index: 5, kind: input, shape index: {}, may-alias: {5,7}]
  %s6 = inlined_call_operand.vmem [shape: f32[2,8,32], index: 6, kind: input, shape index: {}, may-alias: {6,8}]
  %s7 = inlined_call_operand.vmem [shape: f32[2,8,32], index: 7, kind: output, shape index: {0}, may-alias: {5,7}]
  %s8 = inlined_call_operand.vmem [shape: f32[2,8,32], index: 8, kind: output, shape index: {1}, may-alias: {6,8}]
  %9 = xla_tuple %s7, %s8
  %s10 = sld [smem:[#allocation0]]
  $region77: #{step.1} parent=0
    _
  %s12 = ssub.s32 1, %s10
  %s13 = scalar_select 0, %s12, %s10
  $region1: #{step.1} parent=0
    #allocation3 [shape = 'u8[65536]{0}', space=vmem, size = 0x10000, scoped, tag = 'input window, operand 2']
    #allocation4 [shape = 's32[2]{0}', space=sflag, size = 0x8, scoped, tag = 'scoped memory for step.1']
    %14 = vsyncpa [#allocation4], 0
    %s15 = scalar_lea.sflag [#allocation4], 1
    %16 = vsyncpa %s15, 0
    loop: start=0, step=1, limit=4
    $region2: #{step.1} parent=1 // loop_pre_header
      _
    $region3: #{step.1} parent=1 // loop_header
      %s18 = sphi 0, %s22
      %p19 = scmp.ge.s32.totalorder %s18, 4
      %s26 = sphi 0, %s26
      %s28 = sphi 0, %s26
      %s29 = sphi 0, %s28
      %s43 = sphi 0, %s29
      %s47 = sphi 0, %s47
      %s49 = sphi 0, %s47
      %s50 = sphi 0, %s49
      %s64 = sphi 0, %s50
      %s76 = sphi 0, %s78
      %s79 = sphi 0, %s76
      %s80 = sphi 0, %s79
      %s96 = sphi 0, %s80
      %s102 = sphi 0, %s104
      %s105 = sphi 0, %s102
      %s106 = sphi 0, %s105
      %s122 = sphi 0, %s106
      %s128 = sphi 0, %s130
      %s131 = sphi 0, %s128
      %s132 = sphi 0, %s131
      %s148 = sphi 0, %s132
      %s152 = sphi 0, %s152
      %s154 = sphi 0, %s152
      %s155 = sphi 0, %s154
      %s169 = sphi 0, %s155
      %s173 = sphi 0, %s173
      %s175 = sphi 0, %s173
      %s176 = sphi 0, %s175
      %s190 = sphi 0, %s176
      %s194 = sphi 0, %s194
      %s196 = sphi 0, %s194
      %s197 = sphi 0, %s196
      %s211 = sphi 0, %s197
      %s215 = sphi 0, %s215
      %s217 = sphi 0, %s215
      %s218 = sphi 0, %s217
      %s232 = sphi 0, %s218
    $region4: #{step.1} parent=1 // loop_header_branch
      %21 = sbr.rel (%p19) target = $region8
    $region5: #{step.1} parent=1 // loop_body
      %s23 = ssub.s32 %s18, 1
      %s24 = ssub.s32 %s18, 2
      %s25 = sadd.s32 %s18, 1
      %s27 = sadd.s32 %s26, 1
      %p30 = scmp.eq.s32.totalorder %s18, 1
      %p31 = scmp.ne.s32.totalorder %s26, %s28
      %p32 = scmp.eq.s32.totalorder %s18, 0
      %p33 = por %p31, %p32
      %p34 = scmp.ne.s32.totalorder %s26, %s28
      %p35 = scmp.eq.s32.totalorder %s23, 1
      %p36 = por %p34, %p35
      %p37 = scmp.ne.s32.totalorder %s28, %s29
      %p38 = scmp.eq.s32.totalorder %s23, 0
      %p39 = por %p37, %p38
      %p40 = scmp.ne.s32.totalorder %s28, %s29
      %p41 = scmp.eq.s32.totalorder %s24, 1
      %p42 = por %p40, %p41
      %p44 = scmp.ne.s32.totalorder %s29, %s43
      %p45 = scmp.eq.s32.totalorder %s24, 0
      %p46 = por %p44, %p45
      %s48 = sadd.s32 %s47, 1
      %p51 = scmp.eq.s32.totalorder %s18, 1
      %p52 = scmp.ne.s32.totalorder %s47, %s49
      %p53 = scmp.eq.s32.totalorder %s18, 0
      %p54 = por %p52, %p53
      %p55 = scmp.ne.s32.totalorder %s47, %s49
      %p56 = scmp.eq.s32.totalorder %s23, 1
      %p57 = por %p55, %p56
      %p58 = scmp.ne.s32.totalorder %s49, %s50
      %p59 = scmp.eq.s32.totalorder %s23, 0
      %p60 = por %p58, %p59
      %p61 = scmp.ne.s32.totalorder %s49, %s50
      %p62 = scmp.eq.s32.totalorder %s24, 1
      %p63 = por %p61, %p62
      %p65 = scmp.ne.s32.totalorder %s50, %s64
      %p66 = scmp.eq.s32.totalorder %s24, 0
      %p67 = por %p65, %p66
      %s68 = ssub.s32 %s18, 1
      %p69 = scmp.gt.s32.totalorder %s68, 0
      %s70 = scalar_select %p69, %s68, 0
      %s71 = ssub.s32 %s25, 1
      %p72 = scmp.gt.s32.totalorder %s71, 0
      %s73 = scalar_select %p72, %s71, 0
      %s74 = ssub.s32 %s70, %s73
      %p75 = scmp.eq.s32.totalorder %s74, 0
      %s77 = sadd.s32 %s76, 1
      %s78 = scalar_select %p75, %s76, %s77
      %p81 = pneg %p75
      %p82 = scmp.eq.s32.totalorder %s18, 1
      %p83 = por %p81, %p82
      %p84 = scmp.ne.s32.totalorder %s76, %s79
      %p85 = scmp.eq.s32.totalorder %s18, 0
      %p86 = por %p84, %p85
      %p87 = scmp.ne.s32.totalorder %s76, %s79
      %p88 = scmp.eq.s32.totalorder %s23, 1
      %p89 = por %p87, %p88
      %p90 = scmp.ne.s32.totalorder %s79, %s80
      %p91 = scmp.eq.s32.totalorder %s23, 0
      %p92 = por %p90, %p91
      %p93 = scmp.ne.s32.totalorder %s79, %s80
      %p94 = scmp.eq.s32.totalorder %s24, 1
      %p95 = por %p93, %p94
      %p97 = scmp.ne.s32.totalorder %s80, %s96
      %p98 = scmp.eq.s32.totalorder %s24, 0
      %p99 = por %p97, %p98
      %s100 = ssub.s32 %s18, %s25
      %p101 = scmp.eq.s32.totalorder %s100, 0
      %s103 = sadd.s32 %s102, 1
      %s104 = scalar_select %p101, %s102, %s103
      %p107 = pneg %p101
      %p108 = scmp.eq.s32.totalorder %s18, 1
      %p109 = por %p107, %p108
      %p110 = scmp.ne.s32.totalorder %s102, %s105
      %p111 = scmp.eq.s32.totalorder %s18, 0
      %p112 = por %p110, %p111
      %p113 = scmp.ne.s32.totalorder %s102, %s105
      %p114 = scmp.eq.s32.totalorder %s23, 1
      %p115 = por %p113, %p114
      %p116 = scmp.ne.s32.totalorder %s105, %s106
      %p117 = scmp.eq.s32.totalorder %s23, 0
      %p118 = por %p116, %p117
      %p119 = scmp.ne.s32.totalorder %s105, %s106
      %p120 = scmp.eq.s32.totalorder %s24, 1
      %p121 = por %p119, %p120
      %p123 = scmp.ne.s32.totalorder %s106, %s122
      %p124 = scmp.eq.s32.totalorder %s24, 0
      %p125 = por %p123, %p124
      %s126 = ssub.s32 %s18, %s25
      %p127 = scmp.eq.s32.totalorder %s126, 0
      %s129 = sadd.s32 %s128, 1
      %s130 = scalar_select %p127, %s128, %s129
      %p133 = pneg %p127
      %p134 = scmp.eq.s32.totalorder %s18, 1
      %p135 = por %p133, %p134
      %p136 = scmp.ne.s32.totalorder %s128, %s131
      %p137 = scmp.eq.s32.totalorder %s18, 0
      %p138 = por %p136, %p137
      %p139 = scmp.ne.s32.totalorder %s128, %s131
      %p140 = scmp.eq.s32.totalorder %s23, 1
      %p141 = por %p139, %p140
      %p142 = scmp.ne.s32.totalorder %s131, %s132
      %p143 = scmp.eq.s32.totalorder %s23, 0
      %p144 = por %p142, %p143
      %p145 = scmp.ne.s32.totalorder %s131, %s132
      %p146 = scmp.eq.s32.totalorder %s24, 1
      %p147 = por %p145, %p146
      %p149 = scmp.ne.s32.totalorder %s132, %s148
      %p150 = scmp.eq.s32.totalorder %s24, 0
      %p151 = por %p149, %p150
      %s153 = sadd.s32 %s152, 1
      %p156 = scmp.eq.s32.totalorder %s18, 1
      %p157 = scmp.ne.s32.totalorder %s152, %s154
      %p158 = scmp.eq.s32.totalorder %s18, 0
      %p159 = por %p157, %p158
      %p160 = scmp.ne.s32.totalorder %s152, %s154
      %p161 = scmp.eq.s32.totalorder %s23, 1
      %p162 = por %p160, %p161
      %p163 = scmp.ne.s32.totalorder %s154, %s155
      %p164 = scmp.eq.s32.totalorder %s23, 0
      %p165 = por %p163, %p164
      %p166 = scmp.ne.s32.totalorder %s154, %s155
      %p167 = scmp.eq.s32.totalorder %s24, 1
      %p168 = por %p166, %p167
      %p170 = scmp.ne.s32.totalorder %s155, %s169
      %p171 = scmp.eq.s32.totalorder %s24, 0
      %p172 = por %p170, %p171
      %s174 = sadd.s32 %s173, 1
      %p177 = scmp.eq.s32.totalorder %s18, 1
      %p178 = scmp.ne.s32.totalorder %s173, %s175
      %p179 = scmp.eq.s32.totalorder %s18, 0
      %p180 = por %p178, %p179
      %p181 = scmp.ne.s32.totalorder %s173, %s175
      %p182 = scmp.eq.s32.totalorder %s23, 1
      %p183 = por %p181, %p182
      %p184 = scmp.ne.s32.totalorder %s175, %s176
      %p185 = scmp.eq.s32.totalorder %s23, 0
      %p186 = por %p184, %p185
      %p187 = scmp.ne.s32.totalorder %s175, %s176
      %p188 = scmp.eq.s32.totalorder %s24, 1
      %p189 = por %p187, %p188
      %p191 = scmp.ne.s32.totalorder %s176, %s190
      %p192 = scmp.eq.s32.totalorder %s24, 0
      %p193 = por %p191, %p192
      %s195 = sadd.s32 %s194, 1
      %p198 = scmp.eq.s32.totalorder %s18, 1
      %p199 = scmp.ne.s32.totalorder %s194, %s196
      %p200 = scmp.eq.s32.totalorder %s18, 0
      %p201 = por %p199, %p200
      %p202 = scmp.ne.s32.totalorder %s194, %s196
      %p203 = scmp.eq.s32.totalorder %s23, 1
      %p204 = por %p202, %p203
      %p205 = scmp.ne.s32.totalorder %s196, %s197
      %p206 = scmp.eq.s32.totalorder %s23, 0
      %p207 = por %p205, %p206
      %p208 = scmp.ne.s32.totalorder %s196, %s197
      %p209 = scmp.eq.s32.totalorder %s24, 1
      %p210 = por %p208, %p209
      %p212 = scmp.ne.s32.totalorder %s197, %s211
      %p213 = scmp.eq.s32.totalorder %s24, 0
      %p214 = por %p212, %p213
      %s216 = sadd.s32 %s215, 1
      %p219 = scmp.eq.s32.totalorder %s18, 1
      %p220 = scmp.ne.s32.totalorder %s215, %s217
      %p221 = scmp.eq.s32.totalorder %s18, 0
      %p222 = por %p220, %p221
      %p223 = scmp.ne.s32.totalorder %s215, %s217
      %p224 = scmp.eq.s32.totalorder %s23, 1
      %p225 = por %p223, %p224
      %p226 = scmp.ne.s32.totalorder %s217, %s218
      %p227 = scmp.eq.s32.totalorder %s23, 0
      %p228 = por %p226, %p227
      %p229 = scmp.ne.s32.totalorder %s217, %s218
      %p230 = scmp.eq.s32.totalorder %s24, 1
      %p231 = por %p229, %p230
      %p233 = scmp.ne.s32.totalorder %s218, %s232
      %p234 = scmp.eq.s32.totalorder %s24, 0
      %p235 = por %p233, %p234
      %p236 = scmp.le.s32.totalorder 1, %s18
      %p237 = scmp.lt.s32.totalorder %s18, 3
      %p238 = pnand %p236, %p237
      %p239 = pneg %p238
      // Predicated region
      $region9: #{step.1} parent=5 // pred_check
        _
      $region10: #{step.1} parent=5 // pred_check_branch
        %241 = sbr.rel (%p238) target = $region12
      $region11: #{step.1} parent=5 // pred_region
        %s242 = ssub.s32 %s18, 1
        // Predicated region
        $region13: #{step.1} parent=11 // pred_check
          %p243 = pneg %p39
        $region14: #{step.1} parent=11 // pred_check_branch
          %245 = sbr.rel (%p243) target = $region16
        $region15: #{step.1} parent=11 // pred_region
          _
        $region16: #{step.1} parent=11 // pred_fallthru
          _
        // Predicated region
        $region17: #{step.1} parent=11 // pred_check
          %p246 = pneg %p60
        $region18: #{step.1} parent=11 // pred_check_branch
          %248 = sbr.rel (%p246) target = $region20
        $region19: #{step.1} parent=11 // pred_region
          _
        $region20: #{step.1} parent=11 // pred_fallthru
          _
        // Predicated region
        $region21: #{step.1} parent=11 // pred_check
          %p249 = pneg %p165
        $region22: #{step.1} parent=11 // pred_check_branch
          %251 = sbr.rel (%p249) target = $region24
        $region23: #{step.1} parent=11 // pred_region
          _
        $region24: #{step.1} parent=11 // pred_fallthru
          _
        // Predicated region
        $region25: #{step.1} parent=11 // pred_check
          %p252 = pneg %p186
        $region26: #{step.1} parent=11 // pred_check_branch
          %254 = sbr.rel (%p252) target = $region28
        $region27: #{step.1} parent=11 // pred_region
          _
        $region28: #{step.1} parent=11 // pred_fallthru
          _
      $region12: #{step.1} parent=5 // pred_fallthru
        _
      %p255 = scmp.lt.s32.totalorder %s18, 2
      // Predicated region
      $region29: #{step.1} parent=5 // pred_check
        %p256 = pneg %p255
      $region30: #{step.1} parent=5 // pred_check_branch
        %258 = sbr.rel (%p256) target = $region32
      $region31: #{step.1} parent=5 // pred_region
        // Predicated region
        $region33: #{step.1} parent=31 // pred_check
          %p259 = pneg %p86
        $region34: #{step.1} parent=31 // pred_check_branch
          %261 = sbr.rel (%p259) target = $region36
        $region35: #{step.1} parent=31 // pred_region
          %s262 = sand.u32 %s76, 1
          %s263 = scalar_lea.sflag [#allocation4], %s262
          %s264 = sand.u32 %s76, 1
          %s265 = smul.addr %s264, 64
          %s266 = scalar_lea.vmem [#allocation3], %s265
          %s267 = ssub.s32 %s18, 1
          %p268 = scmp.gt.s32.totalorder %s267, 0
          %s269 = scalar_select %p268, %s267, 0
          %s271 = ssub.s32 1024, 1024
          %272 = vsyncadd %s263, %s271
          %s273 = smul.addr %s269, 16
          %s274 = smul.addr %s273, 64
          %s275 = scalar_lea.hbm %s2, %s274
          %s276 = sshll.u32 %s266, 4
          %s277 = int_to_ptr.vmem [resolvable:$true] %s276
          %282 = dma.hbm_to_vmem [thread:$0]  %s275, 1024, %s277, %s263, 64, 64, 4
        $region36: #{step.1} parent=31 // pred_fallthru
          _
        // Predicated region
        $region37: #{step.1} parent=31 // pred_check
          %p283 = pneg %p112
        $region38: #{step.1} parent=31 // pred_check_branch
          %285 = sbr.rel (%p283) target = $region40
        $region39: #{step.1} parent=31 // pred_region
          %p286 = scmp.lt.s32.totalorder %s18, 1
          %s287 = scalar_select %p286, %s18, 1
          %s288 = smul.addr %s287, 16
          %s289 = smul.addr %s288, 4
          %s290 = scalar_lea.vmem %s3, %s289
        $region40: #{step.1} parent=31 // pred_fallthru
          _
        // Predicated region
        $region41: #{step.1} parent=31 // pred_check
          %p291 = pneg %p138
        $region42: #{step.1} parent=31 // pred_check_branch
          %293 = sbr.rel (%p291) target = $region44
        $region43: #{step.1} parent=31 // pred_region
          %p294 = scmp.lt.s32.totalorder %s18, 1
          %s295 = scalar_select %p294, %s18, 1
          %s296 = smul.addr %s295, 4
          %s297 = scalar_lea.vmem %s4, %s296
        $region44: #{step.1} parent=31 // pred_fallthru
          _
      $region32: #{step.1} parent=5 // pred_fallthru
        _
      %p298 = scmp.le.s32.totalorder 1, %s18
      %p299 = scmp.lt.s32.totalorder %s18, 3
      %p300 = pnand %p298, %p299
      %p301 = pneg %p300
      // Predicated region
      $region45: #{step.1} parent=5 // pred_check
        _
      $region46: #{step.1} parent=5 // pred_check_branch
        %303 = sbr.rel (%p300) target = $region48
      $region47: #{step.1} parent=5 // pred_region
        %s304 = ssub.s32 %s18, 1
        %s305 = sand.u32 %s79, 1
        %s306 = scalar_lea.sflag [#allocation4], %s305
        %s307 = sand.u32 %s79, 1
        %s308 = smul.addr %s307, 64
        %s309 = scalar_lea.vmem [#allocation3], %s308
        // Predicated region
        $region49: #{step.1} parent=47 // pred_check
          %p310 = pneg %p92
        $region50: #{step.1} parent=47 // pred_check_branch
          %312 = sbr.rel (%p310) target = $region52
        $region51: #{step.1} parent=47 // pred_region
          %313 = dma.done %s306, 1024
        $region52: #{step.1} parent=47 // pred_fallthru
          _
        %p314 = pneg %p39
        %p315 = pneg %p36
        %p316 = pneg %p60
        %p317 = pneg %p57
        %s318 = sand.u32 %s79, 1
        %s319 = scalar_lea.sflag [#allocation4], %s318
        %s320 = sand.u32 %s79, 1
        %s321 = smul.addr %s320, 64
        %s322 = scalar_lea.vmem [#allocation3], %s321
        %p323 = pneg %p92
        %p324 = pneg %p89
        %p325 = scmp.lt.s32.totalorder %s23, 1
        %s326 = scalar_select %p325, %s23, 1
        %s327 = smul.addr %s326, 16
        %s328 = smul.addr %s327, 4
        %s329 = scalar_lea.vmem %s3, %s328
        %p330 = pneg %p118
        %p331 = pneg %p115
        %p332 = scmp.lt.s32.totalorder %s23, 1
        %s333 = scalar_select %p332, %s23, 1
        %s334 = smul.addr %s333, 4
        %s335 = scalar_lea.vmem %s4, %s334
        %p336 = pneg %p144
        %p337 = pneg %p141
        %p338 = pneg %p165
        %p339 = pneg %p162
        %p340 = pneg %p186
        %p341 = pneg %p183
        %p342 = pneg %p207
        %p343 = pneg %p204
        %p344 = pneg %p228
        %p345 = pneg %p225
        %s346 = ssub.s32 %s23, 1
        %p347 = scmp.gt.s32.totalorder %s346, 0
        %s348 = scalar_select %p347, %s346, 0
        %p349 = scmp.lt.s32.totalorder %s23, 1
        %s350 = scalar_select %p349, %s23, 1
        %s351 = smul.addr %s350, 16
        %s352 = smul.addr %s351, 4
        %s353 = scalar_lea.vmem %s3, %s352
        %p354 = scmp.lt.s32.totalorder %s23, 1
        %s355 = scalar_select %p354, %s23, 1
        %s356 = smul.addr %s355, 4
        %s357 = scalar_lea.vmem %s4, %s356
        %p359 = scmp.eq.s32.totalorder %s23, 0
        // Predicated region
        $region53: #{step.1} parent=47 // pred_check
          %p360 = pneg %p359
        $region54: #{step.1} parent=47 // pred_check_branch
          %362 = sbr.rel (%p360) target = $region56
        $region55: #{step.1} parent=47 // pred_region
          %vm363 = vcmask 261120
          %364 = vst.msk [vmem:[#allocation2] sm:$0xff] %vm363, 0.0
        $region56: #{step.1} parent=47 // pred_fallthru
          _
        %s365 = smul.u32 %s23, 8
        %s366 = scalar_lea.vmem %s5, %s365
        %v367 = vld [vmem:[%s366] sm:$0xff]
        %s368 = scalar_lea.vmem %s6, %s365
        %v369 = vld [vmem:[%s368] sm:$0xff]
        %v370 = vld [vmem:[%s0] sm:$0xff]
        %v371 = vpack.c.bf16 %v370, %v370
        %v372 = vld [vmem:[#allocation2] sm:$0xff]
        %v373 = vpack.c.bf16 %v372, %v372
        %v374 = vpack.c.bf16 %v367, %v367
        %s375 = scalar_select %p359, 1, 0
        %s376 = scvt.s32.f32 %s375
        %s377 = ssub.f32 1.0, %s376
        %v378 = vld [vmem:[%s1] sm:$0xf]
        %v379 = vld [vmem:[%s1 + $0x4] sm:$0xf]
        %v380 = vld [vmem:[%s1 + $0x8] sm:$0xf]
        %v381 = vld [vmem:[%s1 + $0xc] sm:$0xf]
        %v382 = vld [vmem:[%s1 + $0x10] sm:$0xf]
        %v383 = vld [vmem:[%s1 + $0x14] sm:$0xf]
        %v390 = vunpack.c.l.b16 %v378
        %v391 = vunpack.c.l.b16 %v379
        %v392 = vunpack.c.l.b16 %v380
        %v393 = vunpack.c.l.b16 %v381
        %v394 = vunpack.c.l.b16 %v382
        %v395 = vunpack.c.l.b16 %v383
        %v396 = vpack.c.b16 %v391, %v390
        %v397 = vpack.c.b16 %v393, %v392
        %v398 = vpack.c.b16 %v395, %v394
        %vm402 = vcmask 392192
        %v404 = vsel %vm402, %v371, 0
        %406 = vmatprep.subr.bf16.mxu0 0
        %407 = vmatpush1.bf16.msra.mxu0 %v396
        %408 = vmatprep.subr.bf16.mxu0 0
        %409 = vmatpush1.bf16.msra.mxu0 %v397
        %410 = vmatprep.subr.bf16.mxu0 0
        %411 = vmatpush1.bf16.msra.mxu0 %v398
        %412 = vmatprep.subr.bf16.mxu0 0
        %413 = vmatpush1.bf16.msra.mxu0 0
        %414 = vmatprep.subr.bf16.mxu0 0
        %415 = vmatpush1.bf16.msra.mxu0 0
        %416 = vmatprep.subr.bf16.mxu0 0
        %417 = vmatpush1.bf16.msra.mxu0 0
        %418 = vmatprep.subr.bf16.mxu0 0
        %419 = vmatpush1.bf16.msra.mxu0 0
        %420 = vmatprep.subr.bf16.mxu0 0
        %421 = vmatpush1.bf16.msra.mxu0 0
        %422 = vmatprep.subr.bf16.mxu0 0
        %423 = vmatpush1.bf16.msra.mxu0 0
        %424 = vmatprep.subr.bf16.mxu0 0
        %425 = vmatpush1.bf16.msra.mxu0 0
        %426 = vmatprep.subr.bf16.mxu0 0
        %427 = vmatpush1.bf16.msra.mxu0 0
        %428 = vmatprep.subr.bf16.mxu0 0
        %429 = vmatpush1.bf16.msra.mxu0 0
        %430 = vmatprep.subr.bf16.mxu0 0
        %431 = vmatpush1.bf16.msra.mxu0 0
        %432 = vmatprep.subr.bf16.mxu0 0
        %433 = vmatpush1.bf16.msra.mxu0 0
        %434 = vmatprep.subr.bf16.mxu0 0
        %435 = vmatpush1.bf16.msra.mxu0 0
        %436 = vmatprep.subr.bf16.mxu0 0
        %437 = vmatpush1.bf16.msra.mxu0 0
        %438 = vmatprep.mubr.bf16.mxu0 0
        %439 = vmatmul.mubr.bf16.gmra.mrb[0].mxu0 %v404
        %v440 = vpop.f32.mrb[0].mxu0
        %v441 = vadd.f32 0.0, %v440
        %v442 = vpop.f32.mrb[0].mxu0
        %v443 = vpop.f32.mrb[0].mxu0
        %v444 = vpop.f32.mrb[0].mxu0
        %445 = vdwg.mxu0
        %v446 = vld [vmem:[%s309] sm:$0xf]
        %v447 = vld [vmem:[%s309 + $0x4] sm:$0xf]
        %v448 = vld [vmem:[%s309 + $0x8] sm:$0xf]
        %v449 = vld [vmem:[%s309 + $0xc] sm:$0xf]
        %v454 = vunpack.c.l.b16 %v446
        %v455 = vunpack.c.l.b16 %v447
        %v456 = vunpack.c.l.b16 %v448
        %v457 = vunpack.c.l.b16 %v449
        %v458 = vpack.c.b16 %v455, %v454
        %v459 = vpack.c.b16 %v457, %v456
        %vm462 = vcmask 261120
        %v464 = vsel %vm462, %v373, 0
        %466 = vmatprep.subr.bf16.mxu0 0
        %467 = vmatpush1.bf16.msra.mxu0 %v458
        %468 = vmatprep.subr.bf16.mxu0 0
        %469 = vmatpush1.bf16.msra.mxu0 %v459
        %470 = vmatprep.subr.bf16.mxu0 0
        %471 = vmatpush1.bf16.msra.mxu0 0
        %472 = vmatprep.subr.bf16.mxu0 0
        %473 = vmatpush1.bf16.msra.mxu0 0
        %474 = vmatprep.subr.bf16.mxu0 0
        %475 = vmatpush1.bf16.msra.mxu0 0
        %476 = vmatprep.subr.bf16.mxu0 0
        %477 = vmatpush1.bf16.msra.mxu0 0
        %478 = vmatprep.subr.bf16.mxu0 0
        %479 = vmatpush1.bf16.msra.mxu0 0
        %480 = vmatprep.subr.bf16.mxu0 0
        %481 = vmatpush1.bf16.msra.mxu0 0
        %482 = vmatprep.subr.bf16.mxu0 0
        %483 = vmatpush1.bf16.msra.mxu0 0
        %484 = vmatprep.subr.bf16.mxu0 0
        %485 = vmatpush1.bf16.msra.mxu0 0
        %486 = vmatprep.subr.bf16.mxu0 0
        %487 = vmatpush1.bf16.msra.mxu0 0
        %488 = vmatprep.subr.bf16.mxu0 0
        %489 = vmatpush1.bf16.msra.mxu0 0
        %490 = vmatprep.subr.bf16.mxu0 0
        %491 = vmatpush1.bf16.msra.mxu0 0
        %492 = vmatprep.subr.bf16.mxu0 0
        %493 = vmatpush1.bf16.msra.mxu0 0
        %494 = vmatprep.subr.bf16.mxu0 0
        %495 = vmatpush1.bf16.msra.mxu0 0
        %496 = vmatprep.subr.bf16.mxu0 0
        %497 = vmatpush1.bf16.msra.mxu0 0
        %498 = vmatprep.mubr.bf16.mxu0 0
        %499 = vmatmul.mubr.bf16.gmra.mrb[0].mxu0 %v464
        %v500 = vpop.f32.mrb[0].mxu0
        %v501 = vadd.f32 0.0, %v500
        %v502 = vpop.f32.mrb[0].mxu0
        %v503 = vpop.f32.mrb[0].mxu0
        %v504 = vpop.f32.mrb[0].mxu0
        %505 = vdwg.mxu0
        %v506 = vld [vmem:[%s353] sm:$0xf]
        %v507 = vld [vmem:[%s353 + $0x4] sm:$0xf]
        %v508 = vld [vmem:[%s353 + $0x8] sm:$0xf]
        %v509 = vld [vmem:[%s353 + $0xc] sm:$0xf]
        %v514 = vunpack.c.l.b16 %v506
        %v515 = vunpack.c.l.b16 %v507
        %v516 = vunpack.c.l.b16 %v508
        %v517 = vunpack.c.l.b16 %v509
        %v518 = vpack.c.b16 %v515, %v514
        %v519 = vpack.c.b16 %v517, %v516
        %v523 = vsel %vm462, %v374, 0
        %525 = vmatprep.subr.bf16.mxu0 0
        %526 = vmatpush1.bf16.msra.mxu0 %v518
        %527 = vmatprep.subr.bf16.mxu0 0
        %528 = vmatpush1.bf16.msra.mxu0 %v519
        %529 = vmatprep.subr.bf16.mxu0 0
        %530 = vmatpush1.bf16.msra.mxu0 0
        %531 = vmatprep.subr.bf16.mxu0 0
        %532 = vmatpush1.bf16.msra.mxu0 0
        %533 = vmatprep.subr.bf16.mxu0 0
        %534 = vmatpush1.bf16.msra.mxu0 0
        %535 = vmatprep.subr.bf16.mxu0 0
        %536 = vmatpush1.bf16.msra.mxu0 0
        %537 = vmatprep.subr.bf16.mxu0 0
        %538 = vmatpush1.bf16.msra.mxu0 0
        %539 = vmatprep.subr.bf16.mxu0 0
        %540 = vmatpush1.bf16.msra.mxu0 0
        %541 = vmatprep.subr.bf16.mxu0 0
        %542 = vmatpush1.bf16.msra.mxu0 0
        %543 = vmatprep.subr.bf16.mxu0 0
        %544 = vmatpush1.bf16.msra.mxu0 0
        %545 = vmatprep.subr.bf16.mxu0 0
        %546 = vmatpush1.bf16.msra.mxu0 0
        %547 = vmatprep.subr.bf16.mxu0 0
        %548 = vmatpush1.bf16.msra.mxu0 0
        %549 = vmatprep.subr.bf16.mxu0 0
        %550 = vmatpush1.bf16.msra.mxu0 0
        %551 = vmatprep.subr.bf16.mxu0 0
        %552 = vmatpush1.bf16.msra.mxu0 0
        %553 = vmatprep.subr.bf16.mxu0 0
        %554 = vmatpush1.bf16.msra.mxu0 0
        %555 = vmatprep.subr.bf16.mxu0 0
        %556 = vmatpush1.bf16.msra.mxu0 0
        %557 = vmatprep.mubr.bf16.mxu0 0
        %558 = vmatmul.mubr.bf16.gmra.mrb[0].mxu0 %v523
        %v559 = vpop.f32.mrb[0].mxu0
        %v560 = vadd.f32 0.0, %v559
        %v561 = vpop.f32.mrb[0].mxu0
        %v562 = vpop.f32.mrb[0].mxu0
        %v563 = vpop.f32.mrb[0].mxu0
        %564 = vdwg.mxu0
        %v565 = vstv %s376
        %v566 = vmul.f32 %v565, %v441
        %v567 = vstv %s377
        %v568 = vmul.f32 %v567, %v501
        %v569 = vadd.f32 %v566, %v568
        %v570 = vadd.f32 %v569, %v560
        %v571 = vld [vmem:[%s357] sm:$0x1]
        %v573 = vlaneseq
        %v574 = vshrl.u32 %v573, 7
        %v575 = vsub.s32 0, %v574
        %v576 = vrot.slane %v571, %v575
        %v578 = vadd.f32 %v570, %v576
        %s579 = scalar_lea.vmem %s1, 24
        %v580 = vld [vmem:[%s579] sm:$0xf]
        %v581 = vld [vmem:[%s579 + $0x4] sm:$0xf]
        %v582 = vld [vmem:[%s579 + $0x8] sm:$0xf]
        %v583 = vld [vmem:[%s579 + $0xc] sm:$0xf]
        %v584 = vld [vmem:[%s579 + $0x10] sm:$0xf]
        %v585 = vld [vmem:[%s579 + $0x14] sm:$0xf]
        %v592 = vunpack.c.l.b16 %v580
        %v593 = vunpack.c.l.b16 %v581
        %v594 = vunpack.c.l.b16 %v582
        %v595 = vunpack.c.l.b16 %v583
        %v596 = vunpack.c.l.b16 %v584
        %v597 = vunpack.c.l.b16 %v585
        %v598 = vpack.c.b16 %v593, %v592
        %v599 = vpack.c.b16 %v595, %v594
        %v600 = vpack.c.b16 %v597, %v596
        %604 = vmatprep.subr.bf16.mxu0 0
        %605 = vmatpush1.bf16.msra.mxu0 %v598
        %606 = vmatprep.subr.bf16.mxu0 0
        %607 = vmatpush1.bf16.msra.mxu0 %v599
        %608 = vmatprep.subr.bf16.mxu0 0
        %609 = vmatpush1.bf16.msra.mxu0 %v600
        %610 = vmatprep.subr.bf16.mxu0 0
        %611 = vmatpush1.bf16.msra.mxu0 0
        %612 = vmatprep.subr.bf16.mxu0 0
        %613 = vmatpush1.bf16.msra.mxu0 0
        %614 = vmatprep.subr.bf16.mxu0 0
        %615 = vmatpush1.bf16.msra.mxu0 0
        %616 = vmatprep.subr.bf16.mxu0 0
        %617 = vmatpush1.bf16.msra.mxu0 0
        %618 = vmatprep.subr.bf16.mxu0 0
        %619 = vmatpush1.bf16.msra.mxu0 0
        %620 = vmatprep.subr.bf16.mxu0 0
        %621 = vmatpush1.bf16.msra.mxu0 0
        %622 = vmatprep.subr.bf16.mxu0 0
        %623 = vmatpush1.bf16.msra.mxu0 0
        %624 = vmatprep.subr.bf16.mxu0 0
        %625 = vmatpush1.bf16.msra.mxu0 0
        %626 = vmatprep.subr.bf16.mxu0 0
        %627 = vmatpush1.bf16.msra.mxu0 0
        %628 = vmatprep.subr.bf16.mxu0 0
        %629 = vmatpush1.bf16.msra.mxu0 0
        %630 = vmatprep.subr.bf16.mxu0 0
        %631 = vmatpush1.bf16.msra.mxu0 0
        %632 = vmatprep.subr.bf16.mxu0 0
        %633 = vmatpush1.bf16.msra.mxu0 0
        %634 = vmatprep.subr.bf16.mxu0 0
        %635 = vmatpush1.bf16.msra.mxu0 0
        %636 = vmatprep.mubr.bf16.mxu0 0
        %637 = vmatmul.mubr.bf16.gmra.mrb[0].mxu0 %v404
        %v638 = vpop.f32.mrb[0].mxu0
        %v639 = vadd.f32 0.0, %v638
        %v640 = vpop.f32.mrb[0].mxu0
        %v641 = vpop.f32.mrb[0].mxu0
        %v642 = vpop.f32.mrb[0].mxu0
        %643 = vdwg.mxu0
        %s644 = scalar_lea.vmem %s309, 16 [#allocation3]
        %v645 = vld [vmem:[%s644] sm:$0xf]
        %v646 = vld [vmem:[%s644 + $0x4] sm:$0xf]
        %v647 = vld [vmem:[%s644 + $0x8] sm:$0xf]
        %v648 = vld [vmem:[%s644 + $0xc] sm:$0xf]
        %v653 = vunpack.c.l.b16 %v645
        %v654 = vunpack.c.l.b16 %v646
        %v655 = vunpack.c.l.b16 %v647
        %v656 = vunpack.c.l.b16 %v648
        %v657 = vpack.c.b16 %v654, %v653
        %v658 = vpack.c.b16 %v656, %v655
        %661 = vmatprep.subr.bf16.mxu0 0
        %662 = vmatpush1.bf16.msra.mxu0 %v657
        %663 = vmatprep.subr.bf16.mxu0 0
        %664 = vmatpush1.bf16.msra.mxu0 %v658
        %665 = vmatprep.subr.bf16.mxu0 0
        %666 = vmatpush1.bf16.msra.mxu0 0
        %667 = vmatprep.subr.bf16.mxu0 0
        %668 = vmatpush1.bf16.msra.mxu0 0
        %669 = vmatprep.subr.bf16.mxu0 0
        %670 = vmatpush1.bf16.msra.mxu0 0
        %671 = vmatprep.subr.bf16.mxu0 0
        %672 = vmatpush1.bf16.msra.mxu0 0
        %673 = vmatprep.subr.bf16.mxu0 0
        %674 = vmatpush1.bf16.msra.mxu0 0
        %675 = vmatprep.subr.bf16.mxu0 0
        %676 = vmatpush1.bf16.msra.mxu0 0
        %677 = vmatprep.subr.bf16.mxu0 0
        %678 = vmatpush1.bf16.msra.mxu0 0
        %679 = vmatprep.subr.bf16.mxu0 0
        %680 = vmatpush1.bf16.msra.mxu0 0
        %681 = vmatprep.subr.bf16.mxu0 0
        %682 = vmatpush1.bf16.msra.mxu0 0
        %683 = vmatprep.subr.bf16.mxu0 0
        %684 = vmatpush1.bf16.msra.mxu0 0
        %685 = vmatprep.subr.bf16.mxu0 0
        %686 = vmatpush1.bf16.msra.mxu0 0
        %687 = vmatprep.subr.bf16.mxu0 0
        %688 = vmatpush1.bf16.msra.mxu0 0
        %689 = vmatprep.subr.bf16.mxu0 0
        %690 = vmatpush1.bf16.msra.mxu0 0
        %691 = vmatprep.subr.bf16.mxu0 0
        %692 = vmatpush1.bf16.msra.mxu0 0
        %693 = vmatprep.mubr.bf16.mxu0 0
        %694 = vmatmul.mubr.bf16.gmra.mrb[0].mxu0 %v464
        %v695 = vpop.f32.mrb[0].mxu0
        %v696 = vadd.f32 0.0, %v695
        %v697 = vpop.f32.mrb[0].mxu0
        %v698 = vpop.f32.mrb[0].mxu0
        %v699 = vpop.f32.mrb[0].mxu0
        %700 = vdwg.mxu0
        %s701 = scalar_lea.vmem %s353, 16
        %v702 = vld [vmem:[%s701] sm:$0xf]
        %v703 = vld [vmem:[%s701 + $0x4] sm:$0xf]
        %v704 = vld [vmem:[%s701 + $0x8] sm:$0xf]
        %v705 = vld [vmem:[%s701 + $0xc] sm:$0xf]
        %v710 = vunpack.c.l.b16 %v702
        %v711 = vunpack.c.l.b16 %v703
        %v712 = vunpack.c.l.b16 %v704
        %v713 = vunpack.c.l.b16 %v705
        %v714 = vpack.c.b16 %v711, %v710
        %v715 = vpack.c.b16 %v713, %v712
        %718 = vmatprep.subr.bf16.mxu0 0
        %719 = vmatpush1.bf16.msra.mxu0 %v714
        %720 = vmatprep.subr.bf16.mxu0 0
        %721 = vmatpush1.bf16.msra.mxu0 %v715
        %722 = vmatprep.subr.bf16.mxu0 0
        %723 = vmatpush1.bf16.msra.mxu0 0
        %724 = vmatprep.subr.bf16.mxu0 0
        %725 = vmatpush1.bf16.msra.mxu0 0
        %726 = vmatprep.subr.bf16.mxu0 0
        %727 = vmatpush1.bf16.msra.mxu0 0
        %728 = vmatprep.subr.bf16.mxu0 0
        %729 = vmatpush1.bf16.msra.mxu0 0
        %730 = vmatprep.subr.bf16.mxu0 0
        %731 = vmatpush1.bf16.msra.mxu0 0
        %732 = vmatprep.subr.bf16.mxu0 0
        %733 = vmatpush1.bf16.msra.mxu0 0
        %734 = vmatprep.subr.bf16.mxu0 0
        %735 = vmatpush1.bf16.msra.mxu0 0
        %736 = vmatprep.subr.bf16.mxu0 0
        %737 = vmatpush1.bf16.msra.mxu0 0
        %738 = vmatprep.subr.bf16.mxu0 0
        %739 = vmatpush1.bf16.msra.mxu0 0
        %740 = vmatprep.subr.bf16.mxu0 0
        %741 = vmatpush1.bf16.msra.mxu0 0
        %742 = vmatprep.subr.bf16.mxu0 0
        %743 = vmatpush1.bf16.msra.mxu0 0
        %744 = vmatprep.subr.bf16.mxu0 0
        %745 = vmatpush1.bf16.msra.mxu0 0
        %746 = vmatprep.subr.bf16.mxu0 0
        %747 = vmatpush1.bf16.msra.mxu0 0
        %748 = vmatprep.subr.bf16.mxu0 0
        %749 = vmatpush1.bf16.msra.mxu0 0
        %750 = vmatprep.mubr.bf16.mxu0 0
        %751 = vmatmul.mubr.bf16.gmra.mrb[0].mxu0 %v523
        %v752 = vpop.f32.mrb[0].mxu0
        %v753 = vadd.f32 0.0, %v752
        %v754 = vpop.f32.mrb[0].mxu0
        %v755 = vpop.f32.mrb[0].mxu0
        %v756 = vpop.f32.mrb[0].mxu0
        %757 = vdwg.mxu0
        %v758 = vmul.f32 %v565, %v639
        %v759 = vmul.f32 %v567, %v696
        %v760 = vadd.f32 %v758, %v759
        %v761 = vadd.f32 %v760, %v753
        %s762 = scalar_lea.vmem %s357, 1
        %v763 = vld [vmem:[%s762] sm:$0x1]
        %v765 = vlaneseq
        %v766 = vshrl.u32 %v765, 7
        %v767 = vsub.s32 0, %v766
        %v768 = vrot.slane %v763, %v767
        %v770 = vadd.f32 %v761, %v768
        %s771 = scalar_lea.vmem %s1, 48
        %v772 = vld [vmem:[%s771] sm:$0xf]
        %v773 = vld [vmem:[%s771 + $0x4] sm:$0xf]
        %v774 = vld [vmem:[%s771 + $0x8] sm:$0xf]
        %v775 = vld [vmem:[%s771 + $0xc] sm:$0xf]
        %v776 = vld [vmem:[%s771 + $0x10] sm:$0xf]
        %v777 = vld [vmem:[%s771 + $0x14] sm:$0xf]
        %v784 = vunpack.c.l.b16 %v772
        %v785 = vunpack.c.l.b16 %v773
        %v786 = vunpack.c.l.b16 %v774
        %v787 = vunpack.c.l.b16 %v775
        %v788 = vunpack.c.l.b16 %v776
        %v789 = vunpack.c.l.b16 %v777
        %v790 = vpack.c.b16 %v785, %v784
        %v791 = vpack.c.b16 %v787, %v786
        %v792 = vpack.c.b16 %v789, %v788
        %796 = vmatprep.subr.bf16.mxu0 0
        %797 = vmatpush1.bf16.msra.mxu0 %v790
        %798 = vmatprep.subr.bf16.mxu0 0
        %799 = vmatpush1.bf16.msra.mxu0 %v791
        %800 = vmatprep.subr.bf16.mxu0 0
        %801 = vmatpush1.bf16.msra.mxu0 %v792
        %802 = vmatprep.subr.bf16.mxu0 0
        %803 = vmatpush1.bf16.msra.mxu0 0
        %804 = vmatprep.subr.bf16.mxu0 0
        %805 = vmatpush1.bf16.msra.mxu0 0
        %806 = vmatprep.subr.bf16.mxu0 0
        %807 = vmatpush1.bf16.msra.mxu0 0
        %808 = vmatprep.subr.bf16.mxu0 0
        %809 = vmatpush1.bf16.msra.mxu0 0
        %810 = vmatprep.subr.bf16.mxu0 0
        %811 = vmatpush1.bf16.msra.mxu0 0
        %812 = vmatprep.subr.bf16.mxu0 0
        %813 = vmatpush1.bf16.msra.mxu0 0
        %814 = vmatprep.subr.bf16.mxu0 0
        %815 = vmatpush1.bf16.msra.mxu0 0
        %816 = vmatprep.subr.bf16.mxu0 0
        %817 = vmatpush1.bf16.msra.mxu0 0
        %818 = vmatprep.subr.bf16.mxu0 0
        %819 = vmatpush1.bf16.msra.mxu0 0
        %820 = vmatprep.subr.bf16.mxu0 0
        %821 = vmatpush1.bf16.msra.mxu0 0
        %822 = vmatprep.subr.bf16.mxu0 0
        %823 = vmatpush1.bf16.msra.mxu0 0
        %824 = vmatprep.subr.bf16.mxu0 0
        %825 = vmatpush1.bf16.msra.mxu0 0
        %826 = vmatprep.subr.bf16.mxu0 0
        %827 = vmatpush1.bf16.msra.mxu0 0
        %828 = vmatprep.mubr.bf16.mxu0 0
        %829 = vmatmul.mubr.bf16.gmra.mrb[0].mxu0 %v404
        %v830 = vpop.f32.mrb[0].mxu0
        %v831 = vadd.f32 0.0, %v830
        %v832 = vpop.f32.mrb[0].mxu0
        %v833 = vpop.f32.mrb[0].mxu0
        %v834 = vpop.f32.mrb[0].mxu0
        %835 = vdwg.mxu0
        %s836 = scalar_lea.vmem %s309, 32 [#allocation3]
        %v837 = vld [vmem:[%s836] sm:$0xf]
        %v838 = vld [vmem:[%s836 + $0x4] sm:$0xf]
        %v839 = vld [vmem:[%s836 + $0x8] sm:$0xf]
        %v840 = vld [vmem:[%s836 + $0xc] sm:$0xf]
        %v845 = vunpack.c.l.b16 %v837
        %v846 = vunpack.c.l.b16 %v838
        %v847 = vunpack.c.l.b16 %v839
        %v848 = vunpack.c.l.b16 %v840
        %v849 = vpack.c.b16 %v846, %v845
        %v850 = vpack.c.b16 %v848, %v847
        %853 = vmatprep.subr.bf16.mxu0 0
        %854 = vmatpush1.bf16.msra.mxu0 %v849
        %855 = vmatprep.subr.bf16.mxu0 0
        %856 = vmatpush1.bf16.msra.mxu0 %v850
        %857 = vmatprep.subr.bf16.mxu0 0
        %858 = vmatpush1.bf16.msra.mxu0 0
        %859 = vmatprep.subr.bf16.mxu0 0
        %860 = vmatpush1.bf16.msra.mxu0 0
        %861 = vmatprep.subr.bf16.mxu0 0
        %862 = vmatpush1.bf16.msra.mxu0 0
        %863 = vmatprep.subr.bf16.mxu0 0
        %864 = vmatpush1.bf16.msra.mxu0 0
        %865 = vmatprep.subr.bf16.mxu0 0
        %866 = vmatpush1.bf16.msra.mxu0 0
        %867 = vmatprep.subr.bf16.mxu0 0
        %868 = vmatpush1.bf16.msra.mxu0 0
        %869 = vmatprep.subr.bf16.mxu0 0
        %870 = vmatpush1.bf16.msra.mxu0 0
        %871 = vmatprep.subr.bf16.mxu0 0
        %872 = vmatpush1.bf16.msra.mxu0 0
        %873 = vmatprep.subr.bf16.mxu0 0
        %874 = vmatpush1.bf16.msra.mxu0 0
        %875 = vmatprep.subr.bf16.mxu0 0
        %876 = vmatpush1.bf16.msra.mxu0 0
        %877 = vmatprep.subr.bf16.mxu0 0
        %878 = vmatpush1.bf16.msra.mxu0 0
        %879 = vmatprep.subr.bf16.mxu0 0
        %880 = vmatpush1.bf16.msra.mxu0 0
        %881 = vmatprep.subr.bf16.mxu0 0
        %882 = vmatpush1.bf16.msra.mxu0 0
        %883 = vmatprep.subr.bf16.mxu0 0
        %884 = vmatpush1.bf16.msra.mxu0 0
        %885 = vmatprep.mubr.bf16.mxu0 0
        %886 = vmatmul.mubr.bf16.gmra.mrb[0].mxu0 %v464
        %v887 = vpop.f32.mrb[0].mxu0
        %v888 = vadd.f32 0.0, %v887
        %v889 = vpop.f32.mrb[0].mxu0
        %v890 = vpop.f32.mrb[0].mxu0
        %v891 = vpop.f32.mrb[0].mxu0
        %892 = vdwg.mxu0
        %s893 = scalar_lea.vmem %s353, 32
        %v894 = vld [vmem:[%s893] sm:$0xf]
        %v895 = vld [vmem:[%s893 + $0x4] sm:$0xf]
        %v896 = vld [vmem:[%s893 + $0x8] sm:$0xf]
        %v897 = vld [vmem:[%s893 + $0xc] sm:$0xf]
        %v902 = vunpack.c.l.b16 %v894
        %v903 = vunpack.c.l.b16 %v895
        %v904 = vunpack.c.l.b16 %v896
        %v905 = vunpack.c.l.b16 %v897
        %v906 = vpack.c.b16 %v903, %v902
        %v907 = vpack.c.b16 %v905, %v904
        %910 = vmatprep.subr.bf16.mxu0 0
        %911 = vmatpush1.bf16.msra.mxu0 %v906
        %912 = vmatprep.subr.bf16.mxu0 0
        %913 = vmatpush1.bf16.msra.mxu0 %v907
        %914 = vmatprep.subr.bf16.mxu0 0
        %915 = vmatpush1.bf16.msra.mxu0 0
        %916 = vmatprep.subr.bf16.mxu0 0
        %917 = vmatpush1.bf16.msra.mxu0 0
        %918 = vmatprep.subr.bf16.mxu0 0
        %919 = vmatpush1.bf16.msra.mxu0 0
        %920 = vmatprep.subr.bf16.mxu0 0
        %921 = vmatpush1.bf16.msra.mxu0 0
        %922 = vmatprep.subr.bf16.mxu0 0
        %923 = vmatpush1.bf16.msra.mxu0 0
        %924 = vmatprep.subr.bf16.mxu0 0
        %925 = vmatpush1.bf16.msra.mxu0 0
        %926 = vmatprep.subr.bf16.mxu0 0
        %927 = vmatpush1.bf16.msra.mxu0 0
        %928 = vmatprep.subr.bf16.mxu0 0
        %929 = vmatpush1.bf16.msra.mxu0 0
        %930 = vmatprep.subr.bf16.mxu0 0
        %931 = vmatpush1.bf16.msra.mxu0 0
        %932 = vmatprep.subr.bf16.mxu0 0
        %933 = vmatpush1.bf16.msra.mxu0 0
        %934 = vmatprep.subr.bf16.mxu0 0
        %935 = vmatpush1.bf16.msra.mxu0 0
        %936 = vmatprep.subr.bf16.mxu0 0
        %937 = vmatpush1.bf16.msra.mxu0 0
        %938 = vmatprep.subr.bf16.mxu0 0
        %939 = vmatpush1.bf16.msra.mxu0 0
        %940 = vmatprep.subr.bf16.mxu0 0
        %941 = vmatpush1.bf16.msra.mxu0 0
        %942 = vmatprep.mubr.bf16.mxu0 0
        %943 = vmatmul.mubr.bf16.gmra.mrb[0].mxu0 %v523
        %v944 = vpop.f32.mrb[0].mxu0
        %v945 = vadd.f32 0.0, %v944
        %v946 = vpop.f32.mrb[0].mxu0
        %v947 = vpop.f32.mrb[0].mxu0
        %v948 = vpop.f32.mrb[0].mxu0
        %949 = vdwg.mxu0
        %v950 = vmul.f32 %v565, %v831
        %v951 = vmul.f32 %v567, %v888
        %v952 = vadd.f32 %v950, %v951
        %v953 = vadd.f32 %v952, %v945
        %s954 = scalar_lea.vmem %s357, 2
        %v955 = vld [vmem:[%s954] sm:$0x1]
        %v957 = vlaneseq
        %v958 = vshrl.u32 %v957, 7
        %v959 = vsub.s32 0, %v958
        %v960 = vrot.slane %v955, %v959
        %v962 = vadd.f32 %v953, %v960
        %s963 = scalar_lea.vmem %s1, 72
        %v964 = vld [vmem:[%s963] sm:$0xf]
        %v965 = vld [vmem:[%s963 + $0x4] sm:$0xf]
        %v966 = vld [vmem:[%s963 + $0x8] sm:$0xf]
        %v967 = vld [vmem:[%s963 + $0xc] sm:$0xf]
        %v968 = vld [vmem:[%s963 + $0x10] sm:$0xf]
        %v969 = vld [vmem:[%s963 + $0x14] sm:$0xf]
        %v976 = vunpack.c.l.b16 %v964
        %v977 = vunpack.c.l.b16 %v965
        %v978 = vunpack.c.l.b16 %v966
        %v979 = vunpack.c.l.b16 %v967
        %v980 = vunpack.c.l.b16 %v968
        %v981 = vunpack.c.l.b16 %v969
        %v982 = vpack.c.b16 %v977, %v976
        %v983 = vpack.c.b16 %v979, %v978
        %v984 = vpack.c.b16 %v981, %v980
        %988 = vmatprep.subr.bf16.mxu0 0
        %989 = vmatpush1.bf16.msra.mxu0 %v982
        %990 = vmatprep.subr.bf16.mxu0 0
        %991 = vmatpush1.bf16.msra.mxu0 %v983
        %992 = vmatprep.subr.bf16.mxu0 0
        %993 = vmatpush1.bf16.msra.mxu0 %v984
        %994 = vmatprep.subr.bf16.mxu0 0
        %995 = vmatpush1.bf16.msra.mxu0 0
        %996 = vmatprep.subr.bf16.mxu0 0
        %997 = vmatpush1.bf16.msra.mxu0 0
        %998 = vmatprep.subr.bf16.mxu0 0
        %999 = vmatpush1.bf16.msra.mxu0 0
        %1000 = vmatprep.subr.bf16.mxu0 0
        %1001 = vmatpush1.bf16.msra.mxu0 0
        %1002 = vmatprep.subr.bf16.mxu0 0
        %1003 = vmatpush1.bf16.msra.mxu0 0
        %1004 = vmatprep.subr.bf16.mxu0 0
        %1005 = vmatpush1.bf16.msra.mxu0 0
        %1006 = vmatprep.subr.bf16.mxu0 0
        %1007 = vmatpush1.bf16.msra.mxu0 0
        %1008 = vmatprep.subr.bf16.mxu0 0
        %1009 = vmatpush1.bf16.msra.mxu0 0
        %1010 = vmatprep.subr.bf16.mxu0 0
        %1011 = vmatpush1.bf16.msra.mxu0 0
        %1012 = vmatprep.subr.bf16.mxu0 0
        %1013 = vmatpush1.bf16.msra.mxu0 0
        %1014 = vmatprep.subr.bf16.mxu0 0
        %1015 = vmatpush1.bf16.msra.mxu0 0
        %1016 = vmatprep.subr.bf16.mxu0 0
        %1017 = vmatpush1.bf16.msra.mxu0 0
        %1018 = vmatprep.subr.bf16.mxu0 0
        %1019 = vmatpush1.bf16.msra.mxu0 0
        %1020 = vmatprep.mubr.bf16.mxu0 0
        %1021 = vmatmul.mubr.bf16.gmra.mrb[0].mxu0 %v404
        %v1022 = vpop.f32.mrb[0].mxu0
        %v1023 = vadd.f32 0.0, %v1022
        %v1024 = vpop.f32.mrb[0].mxu0
        %v1025 = vpop.f32.mrb[0].mxu0
        %v1026 = vpop.f32.mrb[0].mxu0
        %1027 = vdwg.mxu0
        %s1028 = scalar_lea.vmem %s309, 48 [#allocation3]
        %v1029 = vld [vmem:[%s1028] sm:$0xf]
        %v1030 = vld [vmem:[%s1028 + $0x4] sm:$0xf]
        %v1031 = vld [vmem:[%s1028 + $0x8] sm:$0xf]
        %v1032 = vld [vmem:[%s1028 + $0xc] sm:$0xf]
        %v1037 = vunpack.c.l.b16 %v1029
        %v1038 = vunpack.c.l.b16 %v1030
        %v1039 = vunpack.c.l.b16 %v1031
        %v1040 = vunpack.c.l.b16 %v1032
        %v1041 = vpack.c.b16 %v1038, %v1037
        %v1042 = vpack.c.b16 %v1040, %v1039
        %1045 = vmatprep.subr.bf16.mxu0 0
        %1046 = vmatpush1.bf16.msra.mxu0 %v1041
        %1047 = vmatprep.subr.bf16.mxu0 0
        %1048 = vmatpush1.bf16.msra.mxu0 %v1042
        %1049 = vmatprep.subr.bf16.mxu0 0
        %1050 = vmatpush1.bf16.msra.mxu0 0
        %1051 = vmatprep.subr.bf16.mxu0 0
        %1052 = vmatpush1.bf16.msra.mxu0 0
        %1053 = vmatprep.subr.bf16.mxu0 0
        %1054 = vmatpush1.bf16.msra.mxu0 0
        %1055 = vmatprep.subr.bf16.mxu0 0
        %1056 = vmatpush1.bf16.msra.mxu0 0
        %1057 = vmatprep.subr.bf16.mxu0 0
        %1058 = vmatpush1.bf16.msra.mxu0 0
        %1059 = vmatprep.subr.bf16.mxu0 0
        %1060 = vmatpush1.bf16.msra.mxu0 0
        %1061 = vmatprep.subr.bf16.mxu0 0
        %1062 = vmatpush1.bf16.msra.mxu0 0
        %1063 = vmatprep.subr.bf16.mxu0 0
        %1064 = vmatpush1.bf16.msra.mxu0 0
        %1065 = vmatprep.subr.bf16.mxu0 0
        %1066 = vmatpush1.bf16.msra.mxu0 0
        %1067 = vmatprep.subr.bf16.mxu0 0
        %1068 = vmatpush1.bf16.msra.mxu0 0
        %1069 = vmatprep.subr.bf16.mxu0 0
        %1070 = vmatpush1.bf16.msra.mxu0 0
        %1071 = vmatprep.subr.bf16.mxu0 0
        %1072 = vmatpush1.bf16.msra.mxu0 0
        %1073 = vmatprep.subr.bf16.mxu0 0
        %1074 = vmatpush1.bf16.msra.mxu0 0
        %1075 = vmatprep.subr.bf16.mxu0 0
        %1076 = vmatpush1.bf16.msra.mxu0 0
        %1077 = vmatprep.mubr.bf16.mxu0 0
        %1078 = vmatmul.mubr.bf16.gmra.mrb[0].mxu0 %v464
        %v1079 = vpop.f32.mrb[0].mxu0
        %v1080 = vadd.f32 0.0, %v1079
        %v1081 = vpop.f32.mrb[0].mxu0
        %v1082 = vpop.f32.mrb[0].mxu0
        %v1083 = vpop.f32.mrb[0].mxu0
        %1084 = vdwg.mxu0
        %s1085 = scalar_lea.vmem %s353, 48
        %v1086 = vld [vmem:[%s1085] sm:$0xf]
        %v1087 = vld [vmem:[%s1085 + $0x4] sm:$0xf]
        %v1088 = vld [vmem:[%s1085 + $0x8] sm:$0xf]
        %v1089 = vld [vmem:[%s1085 + $0xc] sm:$0xf]
        %v1094 = vunpack.c.l.b16 %v1086
        %v1095 = vunpack.c.l.b16 %v1087
        %v1096 = vunpack.c.l.b16 %v1088
        %v1097 = vunpack.c.l.b16 %v1089
        %v1098 = vpack.c.b16 %v1095, %v1094
        %v1099 = vpack.c.b16 %v1097, %v1096
        %1102 = vmatprep.subr.bf16.mxu0 0
        %1103 = vmatpush1.bf16.msra.mxu0 %v1098
        %1104 = vmatprep.subr.bf16.mxu0 0
        %1105 = vmatpush1.bf16.msra.mxu0 %v1099
        %1106 = vmatprep.subr.bf16.mxu0 0
        %1107 = vmatpush1.bf16.msra.mxu0 0
        %1108 = vmatprep.subr.bf16.mxu0 0
        %1109 = vmatpush1.bf16.msra.mxu0 0
        %1110 = vmatprep.subr.bf16.mxu0 0
        %1111 = vmatpush1.bf16.msra.mxu0 0
        %1112 = vmatprep.subr.bf16.mxu0 0
        %1113 = vmatpush1.bf16.msra.mxu0 0
        %1114 = vmatprep.subr.bf16.mxu0 0
        %1115 = vmatpush1.bf16.msra.mxu0 0
        %1116 = vmatprep.subr.bf16.mxu0 0
        %1117 = vmatpush1.bf16.msra.mxu0 0
        %1118 = vmatprep.subr.bf16.mxu0 0
        %1119 = vmatpush1.bf16.msra.mxu0 0
        %1120 = vmatprep.subr.bf16.mxu0 0
        %1121 = vmatpush1.bf16.msra.mxu0 0
        %1122 = vmatprep.subr.bf16.mxu0 0
        %1123 = vmatpush1.bf16.msra.mxu0 0
        %1124 = vmatprep.subr.bf16.mxu0 0
        %1125 = vmatpush1.bf16.msra.mxu0 0
        %1126 = vmatprep.subr.bf16.mxu0 0
        %1127 = vmatpush1.bf16.msra.mxu0 0
        %1128 = vmatprep.subr.bf16.mxu0 0
        %1129 = vmatpush1.bf16.msra.mxu0 0
        %1130 = vmatprep.subr.bf16.mxu0 0
        %1131 = vmatpush1.bf16.msra.mxu0 0
        %1132 = vmatprep.subr.bf16.mxu0 0
        %1133 = vmatpush1.bf16.msra.mxu0 0
        %1134 = vmatprep.mubr.bf16.mxu0 0
        %1135 = vmatmul.mubr.bf16.gmra.mrb[0].mxu0 %v523
        %v1136 = vpop.f32.mrb[0].mxu0
        %v1137 = vadd.f32 0.0, %v1136
        %v1138 = vpop.f32.mrb[0].mxu0
        %v1139 = vpop.f32.mrb[0].mxu0
        %v1140 = vpop.f32.mrb[0].mxu0
        %1141 = vdwg.mxu0
        %v1142 = vmul.f32 %v565, %v1023
        %v1143 = vmul.f32 %v567, %v1080
        %v1144 = vadd.f32 %v1142, %v1143
        %v1145 = vadd.f32 %v1144, %v1137
        %s1146 = scalar_lea.vmem %s357, 3
        %v1147 = vld [vmem:[%s1146] sm:$0x1]
        %v1149 = vlaneseq
        %v1150 = vshrl.u32 %v1149, 7
        %v1151 = vsub.s32 0, %v1150
        %v1152 = vrot.slane %v1147, %v1151
        %v1154 = vadd.f32 %v1145, %v1152
        %v1155 = vxor.u32 %v578, 2147483648
        %v1156 = vmul.f32 %v1155, 1.442695
        %v1157 = vpow.pop %v1156
        %v1158 = vadd.f32 %v1157, 1.0
        %v1159 = vrcp.pop %v1158
        %v1160 = vmul.f32 1.0, %v1159
        %v1161 = vxor.u32 %v770, 2147483648
        %v1162 = vmul.f32 %v1161, 1.442695
        %v1163 = vpow.pop %v1162
        %v1164 = vadd.f32 %v1163, 1.0
        %v1165 = vrcp.pop %v1164
        %v1166 = vmul.f32 1.0, %v1165
        %v1167 = vtanh.pop %v962
        %v1168 = vxor.u32 %v1154, 2147483648
        %v1169 = vmul.f32 %v1168, 1.442695
        %v1170 = vpow.pop %v1169
        %v1171 = vadd.f32 %v1170, 1.0
        %v1172 = vrcp.pop %v1171
        %v1173 = vmul.f32 1.0, %v1172
        %v1174 = vmul.f32 %v1166, %v369
        %v1175 = vmul.f32 %v1160, %v1167
        %v1176 = vadd.f32 %v1174, %v1175
        %v1177 = vtanh.pop %v1176
        %v1178 = vmul.f32 %v1173, %v1177
        %s1179 = scalar_lea.vmem %s8, %s365
        %1180 = vst.msk [vmem:[%s1179] sm:$0xff] %vm462, %v1176
        %s1181 = scalar_lea.vmem %s7, %s365
        %1182 = vst.msk [vmem:[%s1181] sm:$0xff] %vm462, %v1178
        %1183 = vst.msk [vmem:[#allocation2] sm:$0xff] %vm462, %v1178
        // Predicated region
        $region57: #{step.1} parent=47 // pred_check
          %p1184 = pneg %p204
        $region58: #{step.1} parent=47 // pred_check_branch
          %1186 = sbr.rel (%p1184) target = $region60
        $region59: #{step.1} parent=47 // pred_region
          _
        $region60: #{step.1} parent=47 // pred_fallthru
          _
        // Predicated region
        $region61: #{step.1} parent=47 // pred_check
          %p1187 = pneg %p225
        $region62: #{step.1} parent=47 // pred_check_branch
          %1189 = sbr.rel (%p1187) target = $region64
        $region63: #{step.1} parent=47 // pred_region
          _
        $region64: #{step.1} parent=47 // pred_fallthru
          _
        // Predicated region
        $region65: #{step.1} parent=47 // pred_check
          %p1190 = pneg %p204
        $region66: #{step.1} parent=47 // pred_check_branch
          %1192 = sbr.rel (%p1190) target = $region68
        $region67: #{step.1} parent=47 // pred_region
          _
        $region68: #{step.1} parent=47 // pred_fallthru
          _
        // Predicated region
        $region69: #{step.1} parent=47 // pred_check
          %p1193 = pneg %p225
        $region70: #{step.1} parent=47 // pred_check_branch
          %1195 = sbr.rel (%p1193) target = $region72
        $region71: #{step.1} parent=47 // pred_region
          _
        $region72: #{step.1} parent=47 // pred_fallthru
          _
      $region48: #{step.1} parent=5 // pred_fallthru
        _
      %p1196 = scmp.le.s32.totalorder 2, %s18
      // Predicated region
      $region73: #{step.1} parent=5 // pred_check
        %p1197 = pneg %p1196
      $region74: #{step.1} parent=5 // pred_check_branch
        %1199 = sbr.rel (%p1197) target = $region76
      $region75: #{step.1} parent=5 // pred_region
        %s1200 = ssub.s32 %s18, 2
      $region76: #{step.1} parent=5 // pred_fallthru
        _
    $region6: #{step.1} parent=1 // loop_footer
      %s22 = sadd.s32 1, %s18
    $region7: #{step.1} parent=1 // loop_footer_branch
      %17 = sbr.rel target = $region3
    $region8: #{step.1} parent=1 // loop_exit
      _
    %1201 = vsyncpa [#allocation4], 1
    %s1202 = scalar_lea.sflag [#allocation4], 1
    %1203 = vsyncpa %s1202, 1

</llo_original>
